<compile_context>
chip_gen: v7x
topology: tpu7x:2x2x1
jax: 0.10.0
libtpu: 0.0.40
codegen_flags: <defaults>
</compile_context>

<pallas_src>
import functools

import jax
import jax.numpy as jnp
from jax.experimental import pallas as pl
from jax.experimental.pallas import tpu as pltpu

SELU_ALPHA = 1.6732632423543772
SELU_SCALE = 1.0507009873554805

LANE = 128   # feature dims AND the node dim are padded to multiples of this


def _round_up(x, m):
    return (x + m - 1) // m * m


def _selu(x):
    # f32 elementwise; exp argument clamped so the unselected branch stays finite.
    return SELU_SCALE * jnp.where(
        x > 0, x, SELU_ALPHA * (jnp.exp(jnp.minimum(x, 0.0)) - 1.0))


@functools.lru_cache(maxsize=1)
def _vmem_budget_bytes():
    """Generation-aware usable VMEM (capacity minus headroom for compiler scratch)."""
    cap = None
    try:
        info = pltpu.get_tpu_info()
        for attr in ("vmem_capacity_bytes", "vmem_bytes"):
            val = getattr(info, attr, None)
            if val:
                cap = int(val)
                break
    except Exception:
        cap = None
    if not cap or cap <= 0:
        cap = 64 << 20          # conservative fallback (v7x per-core VMEM)
    # v5e/v6e (128 MiB) -> ~112 MiB budget; v7x (64 MiB) -> ~56 MiB budget.
    return cap - max(8 << 20, cap // 8)


# ---------------------------------------------------------------------------
# Shared in-kernel pieces
# ---------------------------------------------------------------------------
def _mask_pad_rows(h, valid_rows):
    # Bias broadcast leaks into padded rows; zero them before global reductions.
    n_pad = h.shape[0]
    if valid_rows < n_pad:
        row_ids = jax.lax.broadcasted_iota(jnp.int32, (n_pad, 1), 0)
        h = jnp.where(row_ids < valid_rows, h, 0.0)
    return h


def _tail(h):
    # x / x.sum(); tanh(x)**2; F.normalize(x, dim=1).  Padded rows/cols are zero.
    s = jnp.sum(h, keepdims=True)          # (1, 1) global sum
    h = h * (1.0 / s)                      # exact scalar reciprocal (review fix)
    t = jnp.tanh(h)
    h = t * t
    sumsq = jnp.sum(h * h, axis=1, keepdims=True)
    # F.normalize(eps=1e-12): x / max(||x||, eps) == x * rsqrt(max(sumsq, eps^2))
    return h * jax.lax.rsqrt(jnp.maximum(sumsq, 1e-24))


# ---------------------------------------------------------------------------
# Fused single-call kernel (small graphs: A_hat fully VMEM-resident)
# ---------------------------------------------------------------------------
def _fused_gnn_kernel(a_ref, x_ref, w1_ref, b1_ref, w2_ref, b2_ref,
                      w3_ref, b3_ref, o_ref, *, valid_rows):
    bf16, f32 = jnp.bfloat16, jnp.float32
    # conv1: A_hat @ (X @ W1) + b1, SELU  (dropout(training=False) -> identity)
    h = jnp.dot(x_ref[...], w1_ref[...], preferred_element_type=f32)
    h = jnp.dot(a_ref[...], h.astype(bf16), preferred_element_type=f32)
    h = _selu(h + b1_ref[...]).astype(bf16)      # fused bias+SELU+cast: f32 temp dies here
    # conv2
    h = jnp.dot(h, w2_ref[...], preferred_element_type=f32)
    h = jnp.dot(a_ref[...], h.astype(bf16), preferred_element_type=f32)
    h = _selu(h + b2_ref[...]).astype(bf16)
    # conv3
    h = jnp.dot(h, w3_ref[...], preferred_element_type=f32)
    h = jnp.dot(a_ref[...], h.astype(bf16), preferred_element_type=f32)
    h = h + b3_ref[...]
    # tail
    h = _mask_pad_rows(h, valid_rows)
    o_ref[...] = _tail(h).astype(o_ref.dtype)


# ---------------------------------------------------------------------------
# Tiled per-layer kernels (large graphs: A_hat streamed, H resident)
# ---------------------------------------------------------------------------
def _xw_kernel(x_ref, w_ref, o_ref):
    o_ref[...] = jnp.dot(x_ref[...], w_ref[...],
                         preferred_element_type=jnp.float32).astype(o_ref.dtype)


def _agg_kernel(a_ref, h_ref, b_ref, o_ref, *, apply_selu):
    acc = jnp.dot(a_ref[...], h_ref[...], preferred_element_type=jnp.float32)
    acc = acc + b_ref[...]
    if apply_selu:
        acc = _selu(acc)
    o_ref[...] = acc.astype(o_ref.dtype)


def _tail_kernel(h_ref, o_ref, *, valid_rows):
    h = _mask_pad_rows(h_ref[...], valid_rows)
    o_ref[...] = _tail(h).astype(o_ref.dtype)


# ---------------------------------------------------------------------------
# pallas_call wrappers
# ---------------------------------------------------------------------------
def _full_spec(shape):
    # whole-array block (no grid); last-two-dims rule satisfied by full extents
    return pl.BlockSpec(shape, lambda: (0,) * len(shape))


def _feature_transform(x_bf16, w_bf16, tm, vmem_limit):
    """H = X @ W, row-tiled, bf16 output (feeds the aggregation MXU)."""
    n_pad, d_in = x_bf16.shape
    d_out = w_bf16.shape[1]
    return pl.pallas_call(
        _xw_kernel,
        out_shape=jax.ShapeDtypeStruct((n_pad, d_out), jnp.bfloat16),
        grid=(n_pad // tm,),
        in_specs=[pl.BlockSpec((tm, d_in), lambda i: (i, 0)),
                  pl.BlockSpec((d_in, d_out), lambda i: (0, 0))],
        out_specs=pl.BlockSpec((tm, d_out), lambda i: (i, 0)),
        compiler_params=pltpu.CompilerParams(
            dimension_semantics=("parallel",), vmem_limit_bytes=vmem_limit),
    )(x_bf16, w_bf16)


def _aggregate(a_bf16, h_bf16, b_f32, out_dtype, apply_selu, tm, vmem_limit):
    """out_rowtile = A_rowtile @ H + b (optional SELU); A streamed, H resident."""
    n_pad = a_bf16.shape[0]
    d = h_bf16.shape[1]
    return pl.pallas_call(
        functools.partial(_agg_kernel, apply_selu=apply_selu),
        out_shape=jax.ShapeDtypeStruct((n_pad, d), out_dtype),
        grid=(n_pad // tm,),
        in_specs=[pl.BlockSpec((tm, n_pad), lambda i: (i, 0)),   # streamed A row slab
                  pl.BlockSpec((n_pad, d), lambda i: (0, 0)),    # resident H
                  pl.BlockSpec((1, d), lambda i: (0, 0))],       # bias
        out_specs=pl.BlockSpec((tm, d), lambda i: (i, 0)),
        compiler_params=pltpu.CompilerParams(
            dimension_semantics=("parallel",), vmem_limit_bytes=vmem_limit),
    )(a_bf16, h_bf16, b_f32)


def _epilogue(h_f32, valid_rows, vmem_limit):
    n_pad, d = h_f32.shape
    return pl.pallas_call(
        functools.partial(_tail_kernel, valid_rows=valid_rows),
        out_shape=jax.ShapeDtypeStruct((n_pad, d), jnp.float32),
        in_specs=[_full_spec((n_pad, d))],
        out_specs=_full_spec((n_pad, d)),
        compiler_params=pltpu.CompilerParams(vmem_limit_bytes=vmem_limit),
    )(h_f32)


# ---------------------------------------------------------------------------
# Forward
# ---------------------------------------------------------------------------
def _pad2(a, rows, cols, dtype):
    a = jnp.asarray(a, dtype)
    pr, pc = rows - a.shape[0], cols - a.shape[1]
    if pr or pc:
        a = jnp.pad(a, ((0, pr), (0, pc)))
    return a


def _row_tile(n_pad):
    # Largest of {512, 256, 128} dividing n_pad (>=512 preferred: v6e HBM roofline).
    for tm in (512, 256, 128):
        if n_pad % tm == 0:
            return tm
    return 128


def gnn_forward(a_hat, x, params, *, force_tiled=False):
    (w1, b1, w2, b2, w3, b3) = params
    n, in_dim = x.shape
    h1, h2, out_dim = w1.shape[1], w2.shape[1], w3.shape[1]

    # Node dim padded to a LANE multiple (lane dim of A_hat, K dim of every A@H
    # matmul); feature dims padded to LANE so all matmuls / output stores are
    # lane-dense.  Padded feature columns stay exactly zero through all layers.
    n_pad = _round_up(n, LANE)
    in_pad = _round_up(in_dim, LANE)
    h1_pad = _round_up(h1, LANE)
    h2_pad = _round_up(h2, LANE)
    out_pad = _round_up(out_dim, LANE)

    bf16, f32 = jnp.bfloat16, jnp.float32

    a_p = _pad2(a_hat, n_pad, n_pad, bf16)
    x_p = _pad2(x, n_pad, in_pad, bf16)
    w1_p = _pad2(w1, in_pad, h1_pad, bf16)
    w2_p = _pad2(w2, h1_pad, h2_pad, bf16)
    w3_p = _pad2(w3, h2_pad, out_pad, bf16)
    b1_p = _pad2(jnp.reshape(b1, (1, -1)), 1, h1_pad, f32)
    b2_p = _pad2(jnp.reshape(b2, (1, -1)), 1, h2_pad, f32)
    b3_p = _pad2(jnp.reshape(b3, (1, -1)), 1, out_pad, f32)

    budget = _vmem_budget_bytes()

    # Fused-path footprint estimate (no grid => no input double buffering).
    inputs = (a_p, x_p, w1_p, b1_p, w2_p, b2_p, w3_p, b3_p)
    in_bytes = sum(int(t.size) * t.dtype.itemsize for t in inputs)
    out_bytes = n_pad * out_pad * 4
    feat_max = max(in_pad, h1_pad, h2_pad, out_pad)
    interm_bytes = 6 * n_pad * feat_max * 4      # a handful of live f32 (N,256) temps
    fused_bytes = in_bytes + out_bytes + interm_bytes

    use_fused = (not force_tiled) and (fused_bytes + (8 << 20) <= budget)

    if use_fused:
        # A_hat read from HBM once, resident across all three layers.
        out = pl.pallas_call(
            functools.partial(_fused_gnn_kernel, valid_rows=n),
            out_shape=jax.ShapeDtypeStruct((n_pad, out_pad), f32),
            in_specs=[_full_spec(t.shape) for t in inputs],
            out_specs=_full_spec((n_pad, out_pad)),
            compiler_params=pltpu.CompilerParams(vmem_limit_bytes=budget),
        )(*inputs)
    else:
        # Scalable per-layer path: A_hat streamed in row slabs (never fully
        # VMEM-resident), H = X@W resident (N x <=256 bf16), grid sharded
        # across TensorCores on v7x via dimension_semantics=("parallel",).
        tm = _row_tile(n_pad)
        h = _feature_transform(x_p, w1_p, tm, budget)
        h = _aggregate(a_p, h, b1_p, bf16, True, tm, budget)    # conv1 + SELU
        h = _feature_transform(h, w2_p, tm, budget)
        h = _aggregate(a_p, h, b2_p, bf16, True, tm, budget)    # conv2 + SELU
        h = _feature_transform(h, w3_p, tm, budget)
        h = _aggregate(a_p, h, b3_p, f32, False, tm, budget)    # conv3
        out = _epilogue(h, n, budget)

    return out[:n, :out_dim]


# ---------------------------------------------------------------------------
# Host-side helpers / demo
# ---------------------------------------------------------------------------
def glorot(key, shape):
    fan_in, fan_out = shape
    limit = jnp.sqrt(6.0 / (fan_in + fan_out))
    return jax.random.uniform(key, shape, jnp.float32, -limit, limit)


def ring_edges(n):
    idx = jnp.arange(n)
    src = jnp.concatenate([idx, (idx + 1) % n])
    dst = jnp.concatenate([(idx + 1) % n, idx])
    return jnp.stack([src, dst])


def build_normalized_adjacency(edge_index, num_nodes):
    # dense A from edge_index (2, E), self loops set (not added twice),
    # symmetric normalization D^{-1/2} (A + I) D^{-1/2}
    src, dst = edge_index
    a = jnp.zeros((num_nodes, num_nodes), jnp.float32)
    a = a.at[src, dst].set(1.0)
    a = jnp.where(jnp.eye(num_nodes, dtype=bool), 1.0, a)
    deg = jnp.sum(a, axis=1)
    d_inv_sqrt = 1.0 / jnp.sqrt(jnp.maximum(deg, 1e-12))
    return a * d_inv_sqrt[:, None] * d_inv_sqrt[None, :]


if __name__ == "__main__":
    key = jax.random.PRNGKey(0)
    IN_DIM, OUT_DIM, H1, H2 = 8, 4, 256, 128
    k_x1, k_x2, k1, k2, k3 = jax.random.split(key, 5)

    # GCNConv params: glorot weights, zero biases
    w1 = glorot(k1, (IN_DIM, H1)); b1 = jnp.zeros((1, H1), jnp.float32)
    w2 = glorot(k2, (H1, H2));     b2 = jnp.zeros((1, H2), jnp.float32)
    w3 = glorot(k3, (H2, OUT_DIM)); b3 = jnp.zeros((1, OUT_DIM), jnp.float32)
    params = (w1, b1, w2, b2, w3, b3)

    # --- tiny graph: fused single-call path (N not a LANE multiple -> row masking) ---
    N1 = 12
    x1 = jax.random.normal(k_x1, (N1, IN_DIM), jnp.float32)
    a1 = build_normalized_adjacency(ring_edges(N1), N1)
    out1 = jax.block_until_ready(gnn_forward(a1, x1, params))
    assert out1.shape == (N1, OUT_DIM)
    assert bool(jnp.all(jnp.isfinite(out1)))

    # --- moderate graph: exercise the row-tiled per-layer path and cross-check ---
    N2 = 300                           # pads to 384 -> 3 row tiles of 128
    x2 = jax.random.normal(k_x2, (N2, IN_DIM), jnp.float32)
    a2 = build_normalized_adjacency(ring_edges(N2), N2)
    out_fused = jax.block_until_ready(gnn_forward(a2, x2, params))
    out_tiled = jax.block_until_ready(gnn_forward(a2, x2, params, force_tiled=True))
    assert out_tiled.shape == (N2, OUT_DIM)
    assert bool(jnp.all(jnp.isfinite(out_tiled)))
    assert float(jnp.max(jnp.abs(out_tiled - out_fused))) < 1e-1

    print("KERNEL_OK")
</pallas_src>

<mosaic_0001>
module attributes {stable_mosaic.version = 11 : i64} {
  func.func @_fused_gnn_kernel(%arg0: memref<128x128xbf16, #tpu.memory_space<vmem>>, %arg1: memref<128x128xbf16, #tpu.memory_space<vmem>>, %arg2: memref<128x256xbf16, #tpu.memory_space<vmem>>, %arg3: memref<1x256xf32, #tpu.memory_space<vmem>>, %arg4: memref<256x128xbf16, #tpu.memory_space<vmem>>, %arg5: memref<1x128xf32, #tpu.memory_space<vmem>>, %arg6: memref<128x128xbf16, #tpu.memory_space<vmem>>, %arg7: memref<1x128xf32, #tpu.memory_space<vmem>>, %arg8: memref<128x128xf32, #tpu.memory_space<vmem>>) attributes {dimension_semantics = [], scalar_prefetch = 0 : i64, scratch_operands = 0 : i64, tpu.core_type = #tpu.core_type<tc>} {
    %c0 = arith.constant 0 : index
    %c0_0 = arith.constant 0 : index
    %0 = vector.load %arg1[%c0, %c0_0] : memref<128x128xbf16, #tpu.memory_space<vmem>>, vector<128x128xbf16>
    %c0_1 = arith.constant 0 : index
    %c0_2 = arith.constant 0 : index
    %1 = vector.load %arg2[%c0_1, %c0_2] : memref<128x256xbf16, #tpu.memory_space<vmem>>, vector<128x256xbf16>
    %cst = arith.constant dense<0.000000e+00> : vector<128x256xf32>
    %2 = tpu.matmul %0, %1, %cst {dimension_numbers = #tpu.dot_dimension_numbers<[1], [0], [0], [1], [0, 0, 1, 1], [], []>} : vector<128x128xbf16>, vector<128x256xbf16>, vector<128x256xf32> -> vector<128x256xf32>
    %c0_3 = arith.constant 0 : index
    %c0_4 = arith.constant 0 : index
    %3 = vector.load %arg0[%c0_3, %c0_4] : memref<128x128xbf16, #tpu.memory_space<vmem>>, vector<128x128xbf16>
    %4 = arith.truncf %2 : vector<128x256xf32> to vector<128x256xbf16>
    %cst_5 = arith.constant dense<0.000000e+00> : vector<128x256xf32>
    %5 = tpu.matmul %3, %4, %cst_5 {dimension_numbers = #tpu.dot_dimension_numbers<[1], [0], [0], [1], [0, 0, 1, 1], [], []>} : vector<128x128xbf16>, vector<128x256xbf16>, vector<128x256xf32> -> vector<128x256xf32>
    %c0_6 = arith.constant 0 : index
    %c0_7 = arith.constant 0 : index
    %6 = vector.load %arg3[%c0_6, %c0_7] : memref<1x256xf32, #tpu.memory_space<vmem>>, vector<1x256xf32>
    %7 = vector.broadcast %6 : vector<1x256xf32> to vector<128x256xf32>
    %8 = arith.addf %5, %7 : vector<128x256xf32>
    %cst_8 = arith.constant 0.000000e+00 : f32
    %9 = vector.broadcast %cst_8 : f32 to vector<128x256xf32>
    %10 = arith.cmpf ogt, %8, %9 : vector<128x256xf32>
    %cst_9 = arith.constant 0.000000e+00 : f32
    %11 = vector.broadcast %cst_9 : f32 to vector<128x256xf32>
    %12 = arith.minimumf %8, %11 : vector<128x256xf32>
    %13 = math.exp %12 : vector<128x256xf32>
    %cst_10 = arith.constant 1.000000e+00 : f32
    %14 = vector.broadcast %cst_10 : f32 to vector<128x256xf32>
    %15 = arith.subf %13, %14 : vector<128x256xf32>
    %cst_11 = arith.constant 1.67326319 : f32
    %16 = vector.broadcast %cst_11 : f32 to vector<128x256xf32>
    %17 = arith.mulf %16, %15 : vector<128x256xf32>
    %18 = arith.select %10, %8, %17 : vector<128x256xi1>, vector<128x256xf32>
    %cst_12 = arith.constant 1.05070102 : f32
    %19 = vector.broadcast %cst_12 : f32 to vector<128x256xf32>
    %20 = arith.mulf %19, %18 : vector<128x256xf32>
    %21 = arith.truncf %20 : vector<128x256xf32> to vector<128x256xbf16>
    %c0_13 = arith.constant 0 : index
    %c0_14 = arith.constant 0 : index
    %22 = vector.load %arg4[%c0_13, %c0_14] : memref<256x128xbf16, #tpu.memory_space<vmem>>, vector<256x128xbf16>
    %cst_15 = arith.constant dense<0.000000e+00> : vector<128x128xf32>
    %23 = tpu.matmul %21, %22, %cst_15 {dimension_numbers = #tpu.dot_dimension_numbers<[1], [0], [0], [1], [0, 0, 1, 1], [], []>} : vector<128x256xbf16>, vector<256x128xbf16>, vector<128x128xf32> -> vector<128x128xf32>
    %c0_16 = arith.constant 0 : index
    %c0_17 = arith.constant 0 : index
    %24 = vector.load %arg0[%c0_16, %c0_17] : memref<128x128xbf16, #tpu.memory_space<vmem>>, vector<128x128xbf16>
    %25 = arith.truncf %23 : vector<128x128xf32> to vector<128x128xbf16>
    %cst_18 = arith.constant dense<0.000000e+00> : vector<128x128xf32>
    %26 = tpu.matmul %24, %25, %cst_18 {dimension_numbers = #tpu.dot_dimension_numbers<[1], [0], [0], [1], [0, 0, 1, 1], [], []>} : vector<128x128xbf16>, vector<128x128xbf16>, vector<128x128xf32> -> vector<128x128xf32>
    %c0_19 = arith.constant 0 : index
    %c0_20 = arith.constant 0 : index
    %27 = vector.load %arg5[%c0_19, %c0_20] : memref<1x128xf32, #tpu.memory_space<vmem>>, vector<1x128xf32>
    %28 = vector.broadcast %27 : vector<1x128xf32> to vector<128x128xf32>
    %29 = arith.addf %26, %28 : vector<128x128xf32>
    %cst_21 = arith.constant 0.000000e+00 : f32
    %30 = vector.broadcast %cst_21 : f32 to vector<128x128xf32>
    %31 = arith.cmpf ogt, %29, %30 : vector<128x128xf32>
    %cst_22 = arith.constant 0.000000e+00 : f32
    %32 = vector.broadcast %cst_22 : f32 to vector<128x128xf32>
    %33 = arith.minimumf %29, %32 : vector<128x128xf32>
    %34 = math.exp %33 : vector<128x128xf32>
    %cst_23 = arith.constant 1.000000e+00 : f32
    %35 = vector.broadcast %cst_23 : f32 to vector<128x128xf32>
    %36 = arith.subf %34, %35 : vector<128x128xf32>
    %cst_24 = arith.constant 1.67326319 : f32
    %37 = vector.broadcast %cst_24 : f32 to vector<128x128xf32>
    %38 = arith.mulf %37, %36 : vector<128x128xf32>
    %39 = arith.select %31, %29, %38 : vector<128x128xi1>, vector<128x128xf32>
    %cst_25 = arith.constant 1.05070102 : f32
    %40 = vector.broadcast %cst_25 : f32 to vector<128x128xf32>
    %41 = arith.mulf %40, %39 : vector<128x128xf32>
    %42 = arith.truncf %41 : vector<128x128xf32> to vector<128x128xbf16>
    %c0_26 = arith.constant 0 : index
    %c0_27 = arith.constant 0 : index
    %43 = vector.load %arg6[%c0_26, %c0_27] : memref<128x128xbf16, #tpu.memory_space<vmem>>, vector<128x128xbf16>
    %cst_28 = arith.constant dense<0.000000e+00> : vector<128x128xf32>
    %44 = tpu.matmul %42, %43, %cst_28 {dimension_numbers = #tpu.dot_dimension_numbers<[1], [0], [0], [1], [0, 0, 1, 1], [], []>} : vector<128x128xbf16>, vector<128x128xbf16>, vector<128x128xf32> -> vector<128x128xf32>
    %c0_29 = arith.constant 0 : index
    %c0_30 = arith.constant 0 : index
    %45 = vector.load %arg0[%c0_29, %c0_30] : memref<128x128xbf16, #tpu.memory_space<vmem>>, vector<128x128xbf16>
    %46 = arith.truncf %44 : vector<128x128xf32> to vector<128x128xbf16>
    %cst_31 = arith.constant dense<0.000000e+00> : vector<128x128xf32>
    %47 = tpu.matmul %45, %46, %cst_31 {dimension_numbers = #tpu.dot_dimension_numbers<[1], [0], [0], [1], [0, 0, 1, 1], [], []>} : vector<128x128xbf16>, vector<128x128xbf16>, vector<128x128xf32> -> vector<128x128xf32>
    %c0_32 = arith.constant 0 : index
    %c0_33 = arith.constant 0 : index
    %48 = vector.load %arg7[%c0_32, %c0_33] : memref<1x128xf32, #tpu.memory_space<vmem>>, vector<1x128xf32>
    %49 = vector.broadcast %48 : vector<1x128xf32> to vector<128x128xf32>
    %50 = arith.addf %47, %49 : vector<128x128xf32>
    %51 = tpu.iota {dimensions = array<i32: 0>} : vector<128x1xi32>
    %c12_i32 = arith.constant 12 : i32
    %52 = vector.broadcast %c12_i32 : i32 to vector<128x1xi32>
    %53 = arith.cmpi slt, %51, %52 : vector<128x1xi32>
    %cst_34 = arith.constant 0.000000e+00 : f32
    %54 = vector.shape_cast %53 : vector<128x1xi1> to vector<128x1xi1>
    %55 = vector.broadcast %54 : vector<128x1xi1> to vector<128x128xi1>
    %56 = vector.broadcast %cst_34 : f32 to vector<128x128xf32>
    %57 = arith.select %55, %50, %56 : vector<128x128xi1>, vector<128x128xf32>
    %58 = vector.shape_cast %57 : vector<128x128xf32> to vector<1x128x128xf32>
    %cst_35 = arith.constant dense<0.000000e+00> : vector<1xf32>
    %59 = vector.multi_reduction <add>, %58, %cst_35 [1, 2] : vector<1x128x128xf32> to vector<1xf32>
    %60 = vector.shape_cast %59 : vector<1xf32> to vector<1x1x1xf32>
    %61 = vector.extract %60[0, 0, 0] : f32 from vector<1x1x1xf32>
    %62 = vector.broadcast %61 : f32 to vector<1x1xf32>
    %cst_36 = arith.constant 1.000000e+00 : f32
    %63 = vector.broadcast %cst_36 : f32 to vector<1x1xf32>
    %64 = arith.divf %63, %62 : vector<1x1xf32>
    %65 = vector.broadcast %64 : vector<1x1xf32> to vector<128x128xf32>
    %66 = arith.mulf %57, %65 : vector<128x128xf32>
    %67 = math.tanh %66 : vector<128x128xf32>
    %68 = arith.mulf %67, %67 : vector<128x128xf32>
    %69 = arith.mulf %68, %68 : vector<128x128xf32>
    %cst_37 = arith.constant dense<0.000000e+00> : vector<128xf32>
    %70 = vector.multi_reduction <add>, %69, %cst_37 [1] : vector<128x128xf32> to vector<128xf32>
    %71 = vector.shape_cast %70 : vector<128xf32> to vector<128x1xf32>
    %cst_38 = arith.constant 1.000000e-24 : f32
    %72 = vector.broadcast %cst_38 : f32 to vector<128x1xf32>
    %73 = arith.maximumf %71, %72 : vector<128x1xf32>
    %74 = math.rsqrt %73 : vector<128x1xf32>
    %75 = vector.broadcast %74 : vector<128x1xf32> to vector<128x128xf32>
    %76 = arith.mulf %68, %75 : vector<128x128xf32>
    %c0_39 = arith.constant 0 : index
    %c0_40 = arith.constant 0 : index
    %77 = vector.load %arg8[%c0_39, %c0_40] : memref<128x128xf32, #tpu.memory_space<vmem>>, vector<128x128xf32>
    tpu.vector_store %arg8[%c0_39, %c0_40], %76 {strides = array<i32>} : memref<128x128xf32, #tpu.memory_space<vmem>>, vector<128x128xf32>,
    return
  }
}

</mosaic_0001>

<llo_original>
// kernel: tpu_custom_call.1
$region0: #{tpu_custom_call.1}
  #allocation0 [shape = 'u32[]', space=smem, size = 0x4, offset = 0x4, fixed_abs, tag = 'smem constant byte address 0x4 - core index']
  #allocation1 [shape = 'u32[144,128]{1,0:T(1,128)}', space=vmem, size = 0x12000, scoped, tag = 'internal scratch']
  %s0 = inlined_call_operand.hbm [shape: bf16[128,128], index: 0, kind: input, shape index: {}]
  %s1 = inlined_call_operand.hbm [shape: bf16[128,128], index: 1, kind: input, shape index: {}]
  %s2 = inlined_call_operand.hbm [shape: bf16[128,256], index: 2, kind: input, shape index: {}]
  %s3 = inlined_call_operand.vmem [shape: f32[1,256], index: 3, kind: input, shape index: {}]
  %s4 = inlined_call_operand.hbm [shape: bf16[256,128], index: 4, kind: input, shape index: {}]
  %s5 = inlined_call_operand.vmem [shape: f32[1,128], index: 5, kind: input, shape index: {}]
  %s6 = inlined_call_operand.hbm [shape: bf16[128,128], index: 6, kind: input, shape index: {}]
  %s7 = inlined_call_operand.vmem [shape: f32[1,128], index: 7, kind: input, shape index: {}]
  %s8 = inlined_call_operand.hbm [shape: f32[128,128], index: 8, kind: output, shape index: {}]
  %s9 = sld [smem:[#allocation0]]
  $region62: #{tpu_custom_call.1} parent=0
    _
  %s11 = ssub.s32 1, %s9
  %s12 = scalar_select 0, %s11, %s9
  $region1: #{tpu_custom_call.1} parent=0
    #allocation2 [shape = 'u8[32768]{0}', space=vmem, size = 0x8000, scoped, tag = 'input window, operand 0, single buffered']
    #allocation3 [shape = 's32[1]{0}', space=sflag, size = 0x4, scoped, tag = 'scoped memory for tpu_custom_call.1']
    #allocation4 [shape = 's32[1]{0}', space=sflag, size = 0x4, scoped, tag = 'scoped memory for tpu_custom_call.1']
    #allocation5 [shape = 'u8[32768]{0}', space=vmem, size = 0x8000, scoped, tag = 'input window, operand 1, single buffered']
    #allocation6 [shape = 's32[1]{0}', space=sflag, size = 0x4, scoped, tag = 'scoped memory for tpu_custom_call.1']
    #allocation7 [shape = 'u8[65536]{0}', space=vmem, size = 0x10000, scoped, tag = 'input window, operand 2, single buffered']
    #allocation8 [shape = 'u8[65536]{0}', space=vmem, size = 0x10000, scoped, tag = 'input window, operand 4, single buffered']
    #allocation9 [shape = 's32[1]{0}', space=sflag, size = 0x4, scoped, tag = 'scoped memory for tpu_custom_call.1']
    #allocation10 [shape = 'u8[32768]{0}', space=vmem, size = 0x8000, scoped, tag = 'input window, operand 6, single buffered']
    #allocation11 [shape = 'u8[65536]{0}', space=vmem, size = 0x10000, scoped, tag = 'output window, operand 0, single buffered']
    %13 = vsyncpa [#allocation3], 0
    %14 = vsyncpa [#allocation6], 0
    %15 = vsyncpa [#allocation9], 0
    %16 = vsyncpa [#allocation4], 0
    // Predicated region
    $region2: #{tpu_custom_call.1} parent=1 // pred_check
      _
    $region3: #{tpu_custom_call.1} parent=1 // pred_check_branch
      %18 = sbr.rel (0) target = $region5
    $region4: #{tpu_custom_call.1} parent=1 // pred_region
      %s20 = ssub.s32 1024, 1024
      %21 = vsyncadd [#allocation3], %s20
      %s22 = sshll.u32 [#allocation2], 4
      %s23 = int_to_ptr.vmem [resolvable:$true] %s22
      %28 = dma.hbm_to_vmem [thread:$0]  %s0, 1024, %s23, [#allocation3], 64, 64, 4
    $region5: #{tpu_custom_call.1} parent=1 // pred_fallthru
      _
    // Predicated region
    $region6: #{tpu_custom_call.1} parent=1 // pred_check
      _
    $region7: #{tpu_custom_call.1} parent=1 // pred_check_branch
      %30 = sbr.rel (0) target = $region9
    $region8: #{tpu_custom_call.1} parent=1 // pred_region
      %s32 = ssub.s32 1024, 1024
      %33 = vsyncadd [#allocation6], %s32
      %s34 = sshll.u32 [#allocation5], 4
      %s35 = int_to_ptr.vmem [resolvable:$true] %s34
      %40 = dma.hbm_to_vmem [thread:$0]  %s1, 1024, %s35, [#allocation6], 64, 64, 4
    $region9: #{tpu_custom_call.1} parent=1 // pred_fallthru
      _
    // Predicated region
    $region10: #{tpu_custom_call.1} parent=1 // pred_check
      _
    $region11: #{tpu_custom_call.1} parent=1 // pred_check_branch
      %42 = sbr.rel (0) target = $region13
    $region12: #{tpu_custom_call.1} parent=1 // pred_region
      %s44 = ssub.s32 2048, 2048
      %45 = vsyncadd [#allocation6], %s44
      %s46 = sshll.u32 [#allocation7], 4
      %s47 = int_to_ptr.vmem [resolvable:$true] %s46
      %52 = dma.hbm_to_vmem [thread:$0]  %s2, 2048, %s47, [#allocation6], 128, 128, 8
    $region13: #{tpu_custom_call.1} parent=1 // pred_fallthru
      _
    // Predicated region
    $region14: #{tpu_custom_call.1} parent=1 // pred_check
      _
    $region15: #{tpu_custom_call.1} parent=1 // pred_check_branch
      %54 = sbr.rel (0) target = $region17
    $region16: #{tpu_custom_call.1} parent=1 // pred_region
      _
    $region17: #{tpu_custom_call.1} parent=1 // pred_fallthru
      _
    // Predicated region
    $region18: #{tpu_custom_call.1} parent=1 // pred_check
      _
    $region19: #{tpu_custom_call.1} parent=1 // pred_check_branch
      %56 = sbr.rel (0) target = $region21
    $region20: #{tpu_custom_call.1} parent=1 // pred_region
      %s58 = ssub.s32 2048, 2048
      %59 = vsyncadd [#allocation9], %s58
      %s60 = sshll.u32 [#allocation8], 4
      %s61 = int_to_ptr.vmem [resolvable:$true] %s60
      %66 = dma.hbm_to_vmem [thread:$0]  %s4, 2048, %s61, [#allocation9], 64, 64, 4
    $region21: #{tpu_custom_call.1} parent=1 // pred_fallthru
      _
    // Predicated region
    $region22: #{tpu_custom_call.1} parent=1 // pred_check
      _
    $region23: #{tpu_custom_call.1} parent=1 // pred_check_branch
      %68 = sbr.rel (0) target = $region25
    $region24: #{tpu_custom_call.1} parent=1 // pred_region
      _
    $region25: #{tpu_custom_call.1} parent=1 // pred_fallthru
      _
    // Predicated region
    $region26: #{tpu_custom_call.1} parent=1 // pred_check
      _
    $region27: #{tpu_custom_call.1} parent=1 // pred_check_branch
      %70 = sbr.rel (0) target = $region29
    $region28: #{tpu_custom_call.1} parent=1 // pred_region
      %s72 = ssub.s32 1024, 1024
      %73 = vsyncadd [#allocation9], %s72
      %s74 = sshll.u32 [#allocation10], 4
      %s75 = int_to_ptr.vmem [resolvable:$true] %s74
      %80 = dma.hbm_to_vmem [thread:$0]  %s6, 1024, %s75, [#allocation9], 64, 64, 4
    $region29: #{tpu_custom_call.1} parent=1 // pred_fallthru
      _
    // Predicated region
    $region30: #{tpu_custom_call.1} parent=1 // pred_check
      _
    $region31: #{tpu_custom_call.1} parent=1 // pred_check_branch
      %82 = sbr.rel (0) target = $region33
    $region32: #{tpu_custom_call.1} parent=1 // pred_region
      _
    $region33: #{tpu_custom_call.1} parent=1 // pred_fallthru
      _
    // Predicated region
    $region34: #{tpu_custom_call.1} parent=1 // pred_check
      _
    $region35: #{tpu_custom_call.1} parent=1 // pred_check_branch
      %84 = sbr.rel (0) target = $region37
    $region36: #{tpu_custom_call.1} parent=1 // pred_region
      %85 = dma.done [#allocation3], 1024
    $region37: #{tpu_custom_call.1} parent=1 // pred_fallthru
      _
    // Predicated region
    $region38: #{tpu_custom_call.1} parent=1 // pred_check
      _
    $region39: #{tpu_custom_call.1} parent=1 // pred_check_branch
      %87 = sbr.rel (0) target = $region41
    $region40: #{tpu_custom_call.1} parent=1 // pred_region
      %88 = dma.done [#allocation6], 1024
    $region41: #{tpu_custom_call.1} parent=1 // pred_fallthru
      _
    // Predicated region
    $region42: #{tpu_custom_call.1} parent=1 // pred_check
      _
    $region43: #{tpu_custom_call.1} parent=1 // pred_check_branch
      %90 = sbr.rel (0) target = $region45
    $region44: #{tpu_custom_call.1} parent=1 // pred_region
      %91 = dma.done [#allocation6], 2048
    $region45: #{tpu_custom_call.1} parent=1 // pred_fallthru
      _
    // Predicated region
    $region46: #{tpu_custom_call.1} parent=1 // pred_check
      _
    $region47: #{tpu_custom_call.1} parent=1 // pred_check_branch
      %93 = sbr.rel (0) target = $region49
    $region48: #{tpu_custom_call.1} parent=1 // pred_region
      %94 = dma.done [#allocation9], 2048
    $region49: #{tpu_custom_call.1} parent=1 // pred_fallthru
      _
    // Predicated region
    $region50: #{tpu_custom_call.1} parent=1 // pred_check
      _
    $region51: #{tpu_custom_call.1} parent=1 // pred_check_branch
      %96 = sbr.rel (0) target = $region53
    $region52: #{tpu_custom_call.1} parent=1 // pred_region
      %97 = dma.done [#allocation9], 1024
    $region53: #{tpu_custom_call.1} parent=1 // pred_fallthru
      _
    %v99 = vld [vmem:[#allocation5] sm:$0xf]
    %v100 = vld [vmem:[#allocation5 + $0x4] sm:$0xf]
    %v101 = vld [vmem:[#allocation5 + $0x8] sm:$0xf]
    %v102 = vld [vmem:[#allocation5 + $0xc] sm:$0xf]
    %v103 = vld [vmem:[#allocation5 + $0x10] sm:$0xf]
    %v104 = vld [vmem:[#allocation5 + $0x14] sm:$0xf]
    %v105 = vld [vmem:[#allocation5 + $0x18] sm:$0xf]
    %v106 = vld [vmem:[#allocation5 + $0x1c] sm:$0xf]
    %v107 = vld [vmem:[#allocation5 + $0x20] sm:$0xf]
    %v108 = vld [vmem:[#allocation5 + $0x24] sm:$0xf]
    %v109 = vld [vmem:[#allocation5 + $0x28] sm:$0xf]
    %v110 = vld [vmem:[#allocation5 + $0x2c] sm:$0xf]
    %v111 = vld [vmem:[#allocation5 + $0x30] sm:$0xf]
    %v112 = vld [vmem:[#allocation5 + $0x34] sm:$0xf]
    %v113 = vld [vmem:[#allocation5 + $0x38] sm:$0xf]
    %v114 = vld [vmem:[#allocation5 + $0x3c] sm:$0xf]
    %v115 = vld [vmem:[#allocation7] sm:$0xff]
    %v116 = vld [vmem:[#allocation7 + $0x8] sm:$0xff]
    %v117 = vld [vmem:[#allocation7 + $0x10] sm:$0xff]
    %v118 = vld [vmem:[#allocation7 + $0x18] sm:$0xff]
    %v119 = vld [vmem:[#allocation7 + $0x20] sm:$0xff]
    %v120 = vld [vmem:[#allocation7 + $0x28] sm:$0xff]
    %v121 = vld [vmem:[#allocation7 + $0x30] sm:$0xff]
    %v122 = vld [vmem:[#allocation7 + $0x38] sm:$0xff]
    %v123 = vld [vmem:[#allocation7 + $0x40] sm:$0xff]
    %v124 = vld [vmem:[#allocation7 + $0x48] sm:$0xff]
    %v125 = vld [vmem:[#allocation7 + $0x50] sm:$0xff]
    %v126 = vld [vmem:[#allocation7 + $0x58] sm:$0xff]
    %v127 = vld [vmem:[#allocation7 + $0x60] sm:$0xff]
    %v128 = vld [vmem:[#allocation7 + $0x68] sm:$0xff]
    %v129 = vld [vmem:[#allocation7 + $0x70] sm:$0xff]
    %v130 = vld [vmem:[#allocation7 + $0x78] sm:$0xff]
    %v147 = vunpack.c.l.b16 %v99
    %v148 = vunpack.c.l.b16 %v100
    %v149 = vunpack.c.l.b16 %v101
    %v150 = vunpack.c.l.b16 %v102
    %v151 = vunpack.c.l.b16 %v103
    %v152 = vunpack.c.l.b16 %v104
    %v153 = vunpack.c.l.b16 %v105
    %v154 = vunpack.c.l.b16 %v106
    %v155 = vunpack.c.l.b16 %v107
    %v156 = vunpack.c.l.b16 %v108
    %v157 = vunpack.c.l.b16 %v109
    %v158 = vunpack.c.l.b16 %v110
    %v159 = vunpack.c.l.b16 %v111
    %v160 = vunpack.c.l.b16 %v112
    %v161 = vunpack.c.l.b16 %v113
    %v162 = vunpack.c.l.b16 %v114
    %v163 = vpack.c.b16 %v148, %v147
    %v164 = vpack.c.b16 %v150, %v149
    %v165 = vpack.c.b16 %v152, %v151
    %v166 = vpack.c.b16 %v154, %v153
    %v167 = vpack.c.b16 %v156, %v155
    %v168 = vpack.c.b16 %v158, %v157
    %v169 = vpack.c.b16 %v160, %v159
    %v170 = vpack.c.b16 %v162, %v161
    %v195 = vunpack.c.l.b16 %v115
    %v196 = vunpack.c.h.b16 %v115
    %v197 = vunpack.c.l.b16 %v116
    %v198 = vunpack.c.h.b16 %v116
    %v199 = vunpack.c.l.b16 %v117
    %v200 = vunpack.c.h.b16 %v117
    %v201 = vunpack.c.l.b16 %v118
    %v202 = vunpack.c.h.b16 %v118
    %v203 = vunpack.c.l.b16 %v119
    %v204 = vunpack.c.h.b16 %v119
    %v205 = vunpack.c.l.b16 %v120
    %v206 = vunpack.c.h.b16 %v120
    %v207 = vunpack.c.l.b16 %v121
    %v208 = vunpack.c.h.b16 %v121
    %v209 = vunpack.c.l.b16 %v122
    %v210 = vunpack.c.h.b16 %v122
    %v211 = vunpack.c.l.b16 %v123
    %v212 = vunpack.c.h.b16 %v123
    %v213 = vunpack.c.l.b16 %v124
    %v214 = vunpack.c.h.b16 %v124
    %v215 = vunpack.c.l.b16 %v125
    %v216 = vunpack.c.h.b16 %v125
    %v217 = vunpack.c.l.b16 %v126
    %v218 = vunpack.c.h.b16 %v126
    %v219 = vunpack.c.l.b16 %v127
    %v220 = vunpack.c.h.b16 %v127
    %v221 = vunpack.c.l.b16 %v128
    %v222 = vunpack.c.h.b16 %v128
    %v223 = vunpack.c.l.b16 %v129
    %v224 = vunpack.c.h.b16 %v129
    %v225 = vunpack.c.l.b16 %v130
    %v226 = vunpack.c.h.b16 %v130
    %v227 = vpack.c.b16 %v197, %v195
    %v228 = vpack.c.b16 %v198, %v196
    %v229 = vpack.c.b16 %v201, %v199
    %v230 = vpack.c.b16 %v202, %v200
    %v231 = vpack.c.b16 %v205, %v203
    %v232 = vpack.c.b16 %v206, %v204
    %v233 = vpack.c.b16 %v209, %v207
    %v234 = vpack.c.b16 %v210, %v208
    %v235 = vpack.c.b16 %v213, %v211
    %v236 = vpack.c.b16 %v214, %v212
    %v237 = vpack.c.b16 %v217, %v215
    %v238 = vpack.c.b16 %v218, %v216
    %v239 = vpack.c.b16 %v221, %v219
    %v240 = vpack.c.b16 %v222, %v220
    %v241 = vpack.c.b16 %v225, %v223
    %v242 = vpack.c.b16 %v226, %v224
    %259 = vmatprep.subr.bf16.mxu0 %v228
    %260 = vmatpush1.bf16.msra.mxu0 %v227
    %261 = vmatprep.subr.bf16.mxu0 %v230
    %262 = vmatpush1.bf16.msra.mxu0 %v229
    %263 = vmatprep.subr.bf16.mxu0 %v232
    %264 = vmatpush1.bf16.msra.mxu0 %v231
    %265 = vmatprep.subr.bf16.mxu0 %v234
    %266 = vmatpush1.bf16.msra.mxu0 %v233
    %267 = vmatprep.subr.bf16.mxu0 %v236
    %268 = vmatpush1.bf16.msra.mxu0 %v235
    %269 = vmatprep.subr.bf16.mxu0 %v238
    %270 = vmatpush1.bf16.msra.mxu0 %v237
    %271 = vmatprep.subr.bf16.mxu0 %v240
    %272 = vmatpush1.bf16.msra.mxu0 %v239
    %273 = vmatprep.subr.bf16.mxu0 %v242
    %274 = vmatpush1.bf16.msra.mxu0 %v241
    %275 = vmatprep.subr.bf16.mxu0 0
    %276 = vmatpush1.bf16.msra.mxu0 0
    %277 = vmatprep.subr.bf16.mxu0 0
    %278 = vmatpush1.bf16.msra.mxu0 0
    %279 = vmatprep.subr.bf16.mxu0 0
    %280 = vmatpush1.bf16.msra.mxu0 0
    %281 = vmatprep.subr.bf16.mxu0 0
    %282 = vmatpush1.bf16.msra.mxu0 0
    %283 = vmatprep.subr.bf16.mxu0 0
    %284 = vmatpush1.bf16.msra.mxu0 0
    %285 = vmatprep.subr.bf16.mxu0 0
    %286 = vmatpush1.bf16.msra.mxu0 0
    %287 = vmatprep.subr.bf16.mxu0 0
    %288 = vmatpush1.bf16.msra.mxu0 0
    %289 = vmatprep.subr.bf16.mxu0 0
    %290 = vmatpush1.bf16.msra.mxu0 0
    %291 = vmatprep.mubr.bf16.mxu0 0
    %292 = vmatmul.mubr.bf16.gmra.mrb[0].mxu0 %v163
    %v293 = vpop.f32.mrb[0].mxu0
    %v294 = vadd.f32 0.0, %v293
    %v295 = vpop.f32.mrb[0].mxu0
    %v296 = vadd.f32 0.0, %v295
    %v297 = vpop.f32.mrb[0].mxu0
    %v298 = vadd.f32 0.0, %v297
    %v299 = vpop.f32.mrb[0].mxu0
    %v300 = vadd.f32 0.0, %v299
    %301 = vmatprep.mubr.bf16.mxu0 0
    %302 = vmatmul.mubr.bf16.gmra.mrb[0].mxu0 %v164
    %v303 = vpop.f32.mrb[0].mxu0
    %v304 = vadd.f32 0.0, %v303
    %v305 = vpop.f32.mrb[0].mxu0
    %v306 = vadd.f32 0.0, %v305
    %v307 = vpop.f32.mrb[0].mxu0
    %v308 = vadd.f32 0.0, %v307
    %v309 = vpop.f32.mrb[0].mxu0
    %v310 = vadd.f32 0.0, %v309
    %311 = vmatprep.mubr.bf16.mxu0 0
    %312 = vmatmul.mubr.bf16.gmra.mrb[0].mxu0 %v165
    %v313 = vpop.f32.mrb[0].mxu0
    %v314 = vadd.f32 0.0, %v313
    %v315 = vpop.f32.mrb[0].mxu0
    %v316 = vadd.f32 0.0, %v315
    %v317 = vpop.f32.mrb[0].mxu0
    %v318 = vadd.f32 0.0, %v317
    %v319 = vpop.f32.mrb[0].mxu0
    %v320 = vadd.f32 0.0, %v319
    %321 = vmatprep.mubr.bf16.mxu0 0
    %322 = vmatmul.mubr.bf16.gmra.mrb[0].mxu0 %v166
    %v323 = vpop.f32.mrb[0].mxu0
    %v324 = vadd.f32 0.0, %v323
    %v325 = vpop.f32.mrb[0].mxu0
    %v326 = vadd.f32 0.0, %v325
    %v327 = vpop.f32.mrb[0].mxu0
    %v328 = vadd.f32 0.0, %v327
    %v329 = vpop.f32.mrb[0].mxu0
    %v330 = vadd.f32 0.0, %v329
    %331 = vmatprep.mubr.bf16.mxu0 0
    %332 = vmatmul.mubr.bf16.gmra.mrb[0].mxu0 %v167
    %v333 = vpop.f32.mrb[0].mxu0
    %v334 = vadd.f32 0.0, %v333
    %v335 = vpop.f32.mrb[0].mxu0
    %v336 = vadd.f32 0.0, %v335
    %v337 = vpop.f32.mrb[0].mxu0
    %v338 = vadd.f32 0.0, %v337
    %v339 = vpop.f32.mrb[0].mxu0
    %v340 = vadd.f32 0.0, %v339
    %341 = vmatprep.mubr.bf16.mxu0 0
    %342 = vmatmul.mubr.bf16.gmra.mrb[0].mxu0 %v168
    %v343 = vpop.f32.mrb[0].mxu0
    %v344 = vadd.f32 0.0, %v343
    %v345 = vpop.f32.mrb[0].mxu0
    %v346 = vadd.f32 0.0, %v345
    %v347 = vpop.f32.mrb[0].mxu0
    %v348 = vadd.f32 0.0, %v347
    %v349 = vpop.f32.mrb[0].mxu0
    %v350 = vadd.f32 0.0, %v349
    %351 = vmatprep.mubr.bf16.mxu0 0
    %352 = vmatmul.mubr.bf16.gmra.mrb[0].mxu0 %v169
    %v353 = vpop.f32.mrb[0].mxu0
    %v354 = vadd.f32 0.0, %v353
    %v355 = vpop.f32.mrb[0].mxu0
    %v356 = vadd.f32 0.0, %v355
    %v357 = vpop.f32.mrb[0].mxu0
    %v358 = vadd.f32 0.0, %v357
    %v359 = vpop.f32.mrb[0].mxu0
    %v360 = vadd.f32 0.0, %v359
    %361 = vmatprep.mubr.bf16.mxu0 0
    %362 = vmatmul.mubr.bf16.gmra.mrb[0].mxu0 %v170
    %v363 = vpop.f32.mrb[0].mxu0
    %v364 = vadd.f32 0.0, %v363
    %v365 = vpop.f32.mrb[0].mxu0
    %v366 = vadd.f32 0.0, %v365
    %v367 = vpop.f32.mrb[0].mxu0
    %v368 = vadd.f32 0.0, %v367
    %v369 = vpop.f32.mrb[0].mxu0
    %v370 = vadd.f32 0.0, %v369
    %371 = vdwg.mxu0
    %v372 = vld [vmem:[#allocation2] sm:$0xf]
    %v373 = vld [vmem:[#allocation2 + $0x4] sm:$0xf]
    %v374 = vld [vmem:[#allocation2 + $0x8] sm:$0xf]
    %v375 = vld [vmem:[#allocation2 + $0xc] sm:$0xf]
    %v376 = vld [vmem:[#allocation2 + $0x10] sm:$0xf]
    %v377 = vld [vmem:[#allocation2 + $0x14] sm:$0xf]
    %v378 = vld [vmem:[#allocation2 + $0x18] sm:$0xf]
    %v379 = vld [vmem:[#allocation2 + $0x1c] sm:$0xf]
    %v380 = vld [vmem:[#allocation2 + $0x20] sm:$0xf]
    %v381 = vld [vmem:[#allocation2 + $0x24] sm:$0xf]
    %v382 = vld [vmem:[#allocation2 + $0x28] sm:$0xf]
    %v383 = vld [vmem:[#allocation2 + $0x2c] sm:$0xf]
    %v384 = vld [vmem:[#allocation2 + $0x30] sm:$0xf]
    %v385 = vld [vmem:[#allocation2 + $0x34] sm:$0xf]
    %v386 = vld [vmem:[#allocation2 + $0x38] sm:$0xf]
    %v387 = vld [vmem:[#allocation2 + $0x3c] sm:$0xf]
    %v388 = vpack.c.bf16 %v298, %v294
    %v389 = vpack.c.bf16 %v300, %v296
    %v390 = vpack.c.bf16 %v308, %v304
    %v391 = vpack.c.bf16 %v310, %v306
    %v392 = vpack.c.bf16 %v318, %v314
    %v393 = vpack.c.bf16 %v320, %v316
    %v394 = vpack.c.bf16 %v328, %v324
    %v395 = vpack.c.bf16 %v330, %v326
    %v396 = vpack.c.bf16 %v338, %v334
    %v397 = vpack.c.bf16 %v340, %v336
    %v398 = vpack.c.bf16 %v348, %v344
    %v399 = vpack.c.bf16 %v350, %v346
    %v400 = vpack.c.bf16 %v358, %v354
    %v401 = vpack.c.bf16 %v360, %v356
    %v402 = vpack.c.bf16 %v368, %v364
    %v403 = vpack.c.bf16 %v370, %v366
    %v404 = vld [vmem:[%s3] sm:$0x3]
    %v406 = vlaneseq
    %v407 = vshrl.u32 %v406, 7
    %v408 = vsub.s32 0, %v407
    %v409 = vrot.slane %v404, %v408
    %v410 = vlaneseq
    %v411 = vshrl.u32 %v410, 7
    %v412 = vsub.s32 1, %v411
    %v413 = vrot.slane %v404, %v412
    %v432 = vunpack.c.l.b16 %v372
    %v433 = vunpack.c.l.b16 %v373
    %v434 = vunpack.c.l.b16 %v374
    %v435 = vunpack.c.l.b16 %v375
    %v436 = vunpack.c.l.b16 %v376
    %v437 = vunpack.c.l.b16 %v377
    %v438 = vunpack.c.l.b16 %v378
    %v439 = vunpack.c.l.b16 %v379
    %v440 = vunpack.c.l.b16 %v380
    %v441 = vunpack.c.l.b16 %v381
    %v442 = vunpack.c.l.b16 %v382
    %v443 = vunpack.c.l.b16 %v383
    %v444 = vunpack.c.l.b16 %v384
    %v445 = vunpack.c.l.b16 %v385
    %v446 = vunpack.c.l.b16 %v386
    %v447 = vunpack.c.l.b16 %v387
    %v448 = vpack.c.b16 %v433, %v432
    %v449 = vpack.c.b16 %v435, %v434
    %v450 = vpack.c.b16 %v437, %v436
    %v451 = vpack.c.b16 %v439, %v438
    %v452 = vpack.c.b16 %v441, %v440
    %v453 = vpack.c.b16 %v443, %v442
    %v454 = vpack.c.b16 %v445, %v444
    %v455 = vpack.c.b16 %v447, %v446
    %464 = vmatprep.subr.bf16.mxu0 %v389
    %465 = vmatpush1.bf16.msra.mxu0 %v388
    %466 = vmatprep.subr.bf16.mxu0 %v391
    %467 = vmatpush1.bf16.msra.mxu0 %v390
    %468 = vmatprep.subr.bf16.mxu0 %v393
    %469 = vmatpush1.bf16.msra.mxu0 %v392
    %470 = vmatprep.subr.bf16.mxu0 %v395
    %471 = vmatpush1.bf16.msra.mxu0 %v394
    %472 = vmatprep.subr.bf16.mxu0 %v397
    %473 = vmatpush1.bf16.msra.mxu0 %v396
    %474 = vmatprep.subr.bf16.mxu0 %v399
    %475 = vmatpush1.bf16.msra.mxu0 %v398
    %476 = vmatprep.subr.bf16.mxu0 %v401
    %477 = vmatpush1.bf16.msra.mxu0 %v400
    %478 = vmatprep.subr.bf16.mxu0 %v403
    %479 = vmatpush1.bf16.msra.mxu0 %v402
    %480 = vmatprep.subr.bf16.mxu0 0
    %481 = vmatpush1.bf16.msra.mxu0 0
    %482 = vmatprep.subr.bf16.mxu0 0
    %483 = vmatpush1.bf16.msra.mxu0 0
    %484 = vmatprep.subr.bf16.mxu0 0
    %485 = vmatpush1.bf16.msra.mxu0 0
    %486 = vmatprep.subr.bf16.mxu0 0
    %487 = vmatpush1.bf16.msra.mxu0 0
    %488 = vmatprep.subr.bf16.mxu0 0
    %489 = vmatpush1.bf16.msra.mxu0 0
    %490 = vmatprep.subr.bf16.mxu0 0
    %491 = vmatpush1.bf16.msra.mxu0 0
    %492 = vmatprep.subr.bf16.mxu0 0
    %493 = vmatpush1.bf16.msra.mxu0 0
    %494 = vmatprep.subr.bf16.mxu0 0
    %495 = vmatpush1.bf16.msra.mxu0 0
    %496 = vmatprep.mubr.bf16.mxu0 0
    %497 = vmatmul.mubr.bf16.gmra.mrb[0].mxu0 %v448
    %v498 = vpop.f32.mrb[0].mxu0
    %v499 = vadd.f32 %v409, %v498
    %v500 = vpop.f32.mrb[0].mxu0
    %v501 = vadd.f32 %v413, %v500
    %v502 = vpop.f32.mrb[0].mxu0
    %v503 = vadd.f32 %v409, %v502
    %v504 = vpop.f32.mrb[0].mxu0
    %v505 = vadd.f32 %v413, %v504
    %506 = vmatprep.mubr.bf16.mxu0 0
    %507 = vmatmul.mubr.bf16.gmra.mrb[0].mxu0 %v449
    %v508 = vpop.f32.mrb[0].mxu0
    %v509 = vadd.f32 %v409, %v508
    %v510 = vpop.f32.mrb[0].mxu0
    %v511 = vadd.f32 %v413, %v510
    %v512 = vpop.f32.mrb[0].mxu0
    %v513 = vadd.f32 %v409, %v512
    %v514 = vpop.f32.mrb[0].mxu0
    %v515 = vadd.f32 %v413, %v514
    %516 = vmatprep.mubr.bf16.mxu0 0
    %517 = vmatmul.mubr.bf16.gmra.mrb[0].mxu0 %v450
    %v518 = vpop.f32.mrb[0].mxu0
    %v519 = vadd.f32 %v409, %v518
    %v520 = vpop.f32.mrb[0].mxu0
    %v521 = vadd.f32 %v413, %v520
    %v522 = vpop.f32.mrb[0].mxu0
    %v523 = vadd.f32 %v409, %v522
    %v524 = vpop.f32.mrb[0].mxu0
    %v525 = vadd.f32 %v413, %v524
    %526 = vmatprep.mubr.bf16.mxu0 0
    %527 = vmatmul.mubr.bf16.gmra.mrb[0].mxu0 %v451
    %v528 = vpop.f32.mrb[0].mxu0
    %v529 = vadd.f32 %v409, %v528
    %v530 = vpop.f32.mrb[0].mxu0
    %v531 = vadd.f32 %v413, %v530
    %v532 = vpop.f32.mrb[0].mxu0
    %v533 = vadd.f32 %v409, %v532
    %v534 = vpop.f32.mrb[0].mxu0
    %v535 = vadd.f32 %v413, %v534
    %536 = vmatprep.mubr.bf16.mxu0 0
    %537 = vmatmul.mubr.bf16.gmra.mrb[0].mxu0 %v452
    %v538 = vpop.f32.mrb[0].mxu0
    %v539 = vadd.f32 %v409, %v538
    %v540 = vpop.f32.mrb[0].mxu0
    %v541 = vadd.f32 %v413, %v540
    %v542 = vpop.f32.mrb[0].mxu0
    %v543 = vadd.f32 %v409, %v542
    %v544 = vpop.f32.mrb[0].mxu0
    %v545 = vadd.f32 %v413, %v544
    %546 = vmatprep.mubr.bf16.mxu0 0
    %547 = vmatmul.mubr.bf16.gmra.mrb[0].mxu0 %v453
    %v548 = vpop.f32.mrb[0].mxu0
    %v549 = vadd.f32 %v409, %v548
    %v550 = vpop.f32.mrb[0].mxu0
    %v551 = vadd.f32 %v413, %v550
    %v552 = vpop.f32.mrb[0].mxu0
    %v553 = vadd.f32 %v409, %v552
    %v554 = vpop.f32.mrb[0].mxu0
    %v555 = vadd.f32 %v413, %v554
    %556 = vmatprep.mubr.bf16.mxu0 0
    %557 = vmatmul.mubr.bf16.gmra.mrb[0].mxu0 %v454
    %v558 = vpop.f32.mrb[0].mxu0
    %v559 = vadd.f32 %v409, %v558
    %v560 = vpop.f32.mrb[0].mxu0
    %v561 = vadd.f32 %v413, %v560
    %v562 = vpop.f32.mrb[0].mxu0
    %v563 = vadd.f32 %v409, %v562
    %v564 = vpop.f32.mrb[0].mxu0
    %v565 = vadd.f32 %v413, %v564
    %566 = vmatprep.mubr.bf16.mxu0 0
    %567 = vmatmul.mubr.bf16.gmra.mrb[0].mxu0 %v455
    %v568 = vpop.f32.mrb[0].mxu0
    %v569 = vadd.f32 %v409, %v568
    %v570 = vpop.f32.mrb[0].mxu0
    %v571 = vadd.f32 %v413, %v570
    %v572 = vpop.f32.mrb[0].mxu0
    %v573 = vadd.f32 %v409, %v572
    %v574 = vpop.f32.mrb[0].mxu0
    %v575 = vadd.f32 %v413, %v574
    %576 = vdwg.mxu0
    %vm577 = vcmp.gt.f32.partialorder %v499, 0.0
    %vm578 = vcmp.gt.f32.partialorder %v501, 0.0
    %vm579 = vcmp.gt.f32.partialorder %v503, 0.0
    %vm580 = vcmp.gt.f32.partialorder %v505, 0.0
    %vm581 = vcmp.gt.f32.partialorder %v509, 0.0
    %vm582 = vcmp.gt.f32.partialorder %v511, 0.0
    %vm583 = vcmp.gt.f32.partialorder %v513, 0.0
    %vm584 = vcmp.gt.f32.partialorder %v515, 0.0
    %vm585 = vcmp.gt.f32.partialorder %v519, 0.0
    %vm586 = vcmp.gt.f32.partialorder %v521, 0.0
    %vm587 = vcmp.gt.f32.partialorder %v523, 0.0
    %vm588 = vcmp.gt.f32.partialorder %v525, 0.0
    %vm589 = vcmp.gt.f32.partialorder %v529, 0.0
    %vm590 = vcmp.gt.f32.partialorder %v531, 0.0
    %vm591 = vcmp.gt.f32.partialorder %v533, 0.0
    %vm592 = vcmp.gt.f32.partialorder %v535, 0.0
    %vm593 = vcmp.gt.f32.partialorder %v539, 0.0
    %vm594 = vcmp.gt.f32.partialorder %v541, 0.0
    %vm595 = vcmp.gt.f32.partialorder %v543, 0.0
    %vm596 = vcmp.gt.f32.partialorder %v545, 0.0
    %vm597 = vcmp.gt.f32.partialorder %v549, 0.0
    %vm598 = vcmp.gt.f32.partialorder %v551, 0.0
    %vm599 = vcmp.gt.f32.partialorder %v553, 0.0
    %vm600 = vcmp.gt.f32.partialorder %v555, 0.0
    %vm601 = vcmp.gt.f32.partialorder %v559, 0.0
    %vm602 = vcmp.gt.f32.partialorder %v561, 0.0
    %vm603 = vcmp.gt.f32.partialorder %v563, 0.0
    %vm604 = vcmp.gt.f32.partialorder %v565, 0.0
    %vm605 = vcmp.gt.f32.partialorder %v569, 0.0
    %vm606 = vcmp.gt.f32.partialorder %v571, 0.0
    %vm607 = vcmp.gt.f32.partialorder %v573, 0.0
    %vm608 = vcmp.gt.f32.partialorder %v575, 0.0
    %v609 = vmin.f32 %v499, 0.0
    %v610 = vmin.f32 %v501, 0.0
    %v611 = vmin.f32 %v503, 0.0
    %v612 = vmin.f32 %v505, 0.0
    %v613 = vmin.f32 %v509, 0.0
    %v614 = vmin.f32 %v511, 0.0
    %v615 = vmin.f32 %v513, 0.0
    %v616 = vmin.f32 %v515, 0.0
    %v617 = vmin.f32 %v519, 0.0
    %v618 = vmin.f32 %v521, 0.0
    %v619 = vmin.f32 %v523, 0.0
    %v620 = vmin.f32 %v525, 0.0
    %v621 = vmin.f32 %v529, 0.0
    %v622 = vmin.f32 %v531, 0.0
    %v623 = vmin.f32 %v533, 0.0
    %v624 = vmin.f32 %v535, 0.0
    %v625 = vmin.f32 %v539, 0.0
    %v626 = vmin.f32 %v541, 0.0
    %v627 = vmin.f32 %v543, 0.0
    %v628 = vmin.f32 %v545, 0.0
    %v629 = vmin.f32 %v549, 0.0
    %v630 = vmin.f32 %v551, 0.0
    %v631 = vmin.f32 %v553, 0.0
    %v632 = vmin.f32 %v555, 0.0
    %v633 = vmin.f32 %v559, 0.0
    %v634 = vmin.f32 %v561, 0.0
    %v635 = vmin.f32 %v563, 0.0
    %v636 = vmin.f32 %v565, 0.0
    %v637 = vmin.f32 %v569, 0.0
    %v638 = vmin.f32 %v571, 0.0
    %v639 = vmin.f32 %v573, 0.0
    %v640 = vmin.f32 %v575, 0.0
    %v641 = vmul.f32 %v609, 1.442695
    %v642 = vpow.pop %v641
    %v643 = vmul.f32 %v610, 1.442695
    %v644 = vpow.pop %v643
    %v645 = vmul.f32 %v611, 1.442695
    %v646 = vpow.pop %v645
    %v647 = vmul.f32 %v612, 1.442695
    %v648 = vpow.pop %v647
    %v649 = vmul.f32 %v613, 1.442695
    %v650 = vpow.pop %v649
    %v651 = vmul.f32 %v614, 1.442695
    %v652 = vpow.pop %v651
    %v653 = vmul.f32 %v615, 1.442695
    %v654 = vpow.pop %v653
    %v655 = vmul.f32 %v616, 1.442695
    %v656 = vpow.pop %v655
    %v657 = vmul.f32 %v617, 1.442695
    %v658 = vpow.pop %v657
    %v659 = vmul.f32 %v618, 1.442695
    %v660 = vpow.pop %v659
    %v661 = vmul.f32 %v619, 1.442695
    %v662 = vpow.pop %v661
    %v663 = vmul.f32 %v620, 1.442695
    %v664 = vpow.pop %v663
    %v665 = vmul.f32 %v621, 1.442695
    %v666 = vpow.pop %v665
    %v667 = vmul.f32 %v622, 1.442695
    %v668 = vpow.pop %v667
    %v669 = vmul.f32 %v623, 1.442695
    %v670 = vpow.pop %v669
    %v671 = vmul.f32 %v624, 1.442695
    %v672 = vpow.pop %v671
    %v673 = vmul.f32 %v625, 1.442695
    %v674 = vpow.pop %v673
    %v675 = vmul.f32 %v626, 1.442695
    %v676 = vpow.pop %v675
    %v677 = vmul.f32 %v627, 1.442695
    %v678 = vpow.pop %v677
    %v679 = vmul.f32 %v628, 1.442695
    %v680 = vpow.pop %v679
    %v681 = vmul.f32 %v629, 1.442695
    %v682 = vpow.pop %v681
    %v683 = vmul.f32 %v630, 1.442695
    %v684 = vpow.pop %v683
    %v685 = vmul.f32 %v631, 1.442695
    %v686 = vpow.pop %v685
    %v687 = vmul.f32 %v632, 1.442695
    %v688 = vpow.pop %v687
    %v689 = vmul.f32 %v633, 1.442695
    %v690 = vpow.pop %v689
    %v691 = vmul.f32 %v634, 1.442695
    %v692 = vpow.pop %v691
    %v693 = vmul.f32 %v635, 1.442695
    %v694 = vpow.pop %v693
    %v695 = vmul.f32 %v636, 1.442695
    %v696 = vpow.pop %v695
    %v697 = vmul.f32 %v637, 1.442695
    %v698 = vpow.pop %v697
    %v699 = vmul.f32 %v638, 1.442695
    %v700 = vpow.pop %v699
    %v701 = vmul.f32 %v639, 1.442695
    %v702 = vpow.pop %v701
    %v703 = vmul.f32 %v640, 1.442695
    %v704 = vpow.pop %v703
    %v705 = vsub.f32 %v642, 1.0
    %v706 = vsub.f32 %v644, 1.0
    %v707 = vsub.f32 %v646, 1.0
    %v708 = vsub.f32 %v648, 1.0
    %v709 = vsub.f32 %v650, 1.0
    %v710 = vsub.f32 %v652, 1.0
    %v711 = vsub.f32 %v654, 1.0
    %v712 = vsub.f32 %v656, 1.0
    %v713 = vsub.f32 %v658, 1.0
    %v714 = vsub.f32 %v660, 1.0
    %v715 = vsub.f32 %v662, 1.0
    %v716 = vsub.f32 %v664, 1.0
    %v717 = vsub.f32 %v666, 1.0
    %v718 = vsub.f32 %v668, 1.0
    %v719 = vsub.f32 %v670, 1.0
    %v720 = vsub.f32 %v672, 1.0
    %v721 = vsub.f32 %v674, 1.0
    %v722 = vsub.f32 %v676, 1.0
    %v723 = vsub.f32 %v678, 1.0
    %v724 = vsub.f32 %v680, 1.0
    %v725 = vsub.f32 %v682, 1.0
    %v726 = vsub.f32 %v684, 1.0
    %v727 = vsub.f32 %v686, 1.0
    %v728 = vsub.f32 %v688, 1.0
    %v729 = vsub.f32 %v690, 1.0
    %v730 = vsub.f32 %v692, 1.0
    %v731 = vsub.f32 %v694, 1.0
    %v732 = vsub.f32 %v696, 1.0
    %v733 = vsub.f32 %v698, 1.0
    %v734 = vsub.f32 %v700, 1.0
    %v735 = vsub.f32 %v702, 1.0
    %v736 = vsub.f32 %v704, 1.0
    %v737 = vmul.f32 %v705, 1.6732632
    %v738 = vmul.f32 %v706, 1.6732632
    %v739 = vmul.f32 %v707, 1.6732632
    %v740 = vmul.f32 %v708, 1.6732632
    %v741 = vmul.f32 %v709, 1.6732632
    %v742 = vmul.f32 %v710, 1.6732632
    %v743 = vmul.f32 %v711, 1.6732632
    %v744 = vmul.f32 %v712, 1.6732632
    %v745 = vmul.f32 %v713, 1.6732632
    %v746 = vmul.f32 %v714, 1.6732632
    %v747 = vmul.f32 %v715, 1.6732632
    %v748 = vmul.f32 %v716, 1.6732632
    %v749 = vmul.f32 %v717, 1.6732632
    %v750 = vmul.f32 %v718, 1.6732632
    %v751 = vmul.f32 %v719, 1.6732632
    %v752 = vmul.f32 %v720, 1.6732632
    %v753 = vmul.f32 %v721, 1.6732632
    %v754 = vmul.f32 %v722, 1.6732632
    %v755 = vmul.f32 %v723, 1.6732632
    %v756 = vmul.f32 %v724, 1.6732632
    %v757 = vmul.f32 %v725, 1.6732632
    %v758 = vmul.f32 %v726, 1.6732632
    %v759 = vmul.f32 %v727, 1.6732632
    %v760 = vmul.f32 %v728, 1.6732632
    %v761 = vmul.f32 %v729, 1.6732632
    %v762 = vmul.f32 %v730, 1.6732632
    %v763 = vmul.f32 %v731, 1.6732632
    %v764 = vmul.f32 %v732, 1.6732632
    %v765 = vmul.f32 %v733, 1.6732632
    %v766 = vmul.f32 %v734, 1.6732632
    %v767 = vmul.f32 %v735, 1.6732632
    %v768 = vmul.f32 %v736, 1.6732632
    %v769 = vsel %vm577, %v499, %v737
    %v770 = vsel %vm578, %v501, %v738
    %v771 = vsel %vm579, %v503, %v739
    %v772 = vsel %vm580, %v505, %v740
    %v773 = vsel %vm581, %v509, %v741
    %v774 = vsel %vm582, %v511, %v742
    %v775 = vsel %vm583, %v513, %v743
    %v776 = vsel %vm584, %v515, %v744
    %v777 = vsel %vm585, %v519, %v745
    %v778 = vsel %vm586, %v521, %v746
    %v779 = vsel %vm587, %v523, %v747
    %v780 = vsel %vm588, %v525, %v748
    %v781 = vsel %vm589, %v529, %v749
    %v782 = vsel %vm590, %v531, %v750
    %v783 = vsel %vm591, %v533, %v751
    %v784 = vsel %vm592, %v535, %v752
    %v785 = vsel %vm593, %v539, %v753
    %v786 = vsel %vm594, %v541, %v754
    %v787 = vsel %vm595, %v543, %v755
    %v788 = vsel %vm596, %v545, %v756
    %v789 = vsel %vm597, %v549, %v757
    %v790 = vsel %vm598, %v551, %v758
    %v791 = vsel %vm599, %v553, %v759
    %v792 = vsel %vm600, %v555, %v760
    %v793 = vsel %vm601, %v559, %v761
    %v794 = vsel %vm602, %v561, %v762
    %v795 = vsel %vm603, %v563, %v763
    %v796 = vsel %vm604, %v565, %v764
    %v797 = vsel %vm605, %v569, %v765
    %v798 = vsel %vm606, %v571, %v766
    %v799 = vsel %vm607, %v573, %v767
    %v800 = vsel %vm608, %v575, %v768
    %v801 = vmul.f32 %v769, 1.050701
    %v802 = vmul.f32 %v770, 1.050701
    %v803 = vmul.f32 %v771, 1.050701
    %v804 = vmul.f32 %v772, 1.050701
    %v805 = vmul.f32 %v773, 1.050701
    %v806 = vmul.f32 %v774, 1.050701
    %v807 = vmul.f32 %v775, 1.050701
    %v808 = vmul.f32 %v776, 1.050701
    %v809 = vmul.f32 %v777, 1.050701
    %v810 = vmul.f32 %v778, 1.050701
    %v811 = vmul.f32 %v779, 1.050701
    %v812 = vmul.f32 %v780, 1.050701
    %v813 = vmul.f32 %v781, 1.050701
    %v814 = vmul.f32 %v782, 1.050701
    %v815 = vmul.f32 %v783, 1.050701
    %v816 = vmul.f32 %v784, 1.050701
    %v817 = vmul.f32 %v785, 1.050701
    %v818 = vmul.f32 %v786, 1.050701
    %v819 = vmul.f32 %v787, 1.050701
    %v820 = vmul.f32 %v788, 1.050701
    %v821 = vmul.f32 %v789, 1.050701
    %v822 = vmul.f32 %v790, 1.050701
    %v823 = vmul.f32 %v791, 1.050701
    %v824 = vmul.f32 %v792, 1.050701
    %v825 = vmul.f32 %v793, 1.050701
    %v826 = vmul.f32 %v794, 1.050701
    %v827 = vmul.f32 %v795, 1.050701
    %v828 = vmul.f32 %v796, 1.050701
    %v829 = vmul.f32 %v797, 1.050701
    %v830 = vmul.f32 %v798, 1.050701
    %v831 = vmul.f32 %v799, 1.050701
    %v832 = vmul.f32 %v800, 1.050701
    %v833 = vpack.c.bf16 %v803, %v801
    %v834 = vpack.c.bf16 %v804, %v802
    %v835 = vpack.c.bf16 %v807, %v805
    %v836 = vpack.c.bf16 %v808, %v806
    %v837 = vpack.c.bf16 %v811, %v809
    %v838 = vpack.c.bf16 %v812, %v810
    %v839 = vpack.c.bf16 %v815, %v813
    %v840 = vpack.c.bf16 %v816, %v814
    %v841 = vpack.c.bf16 %v819, %v817
    %v842 = vpack.c.bf16 %v820, %v818
    %v843 = vpack.c.bf16 %v823, %v821
    %v844 = vpack.c.bf16 %v824, %v822
    %v845 = vpack.c.bf16 %v827, %v825
    %v846 = vpack.c.bf16 %v828, %v826
    %v847 = vpack.c.bf16 %v831, %v829
    %v848 = vpack.c.bf16 %v832, %v830
    %v849 = vld [vmem:[#allocation8] sm:$0xf]
    %v850 = vld [vmem:[#allocation8 + $0x4] sm:$0xf]
    %v851 = vld [vmem:[#allocation8 + $0x8] sm:$0xf]
    %v852 = vld [vmem:[#allocation8 + $0xc] sm:$0xf]
    %v853 = vld [vmem:[#allocation8 + $0x10] sm:$0xf]
    %v854 = vld [vmem:[#allocation8 + $0x14] sm:$0xf]
    %v855 = vld [vmem:[#allocation8 + $0x18] sm:$0xf]
    %v856 = vld [vmem:[#allocation8 + $0x1c] sm:$0xf]
    %v857 = vld [vmem:[#allocation8 + $0x20] sm:$0xf]
    %v858 = vld [vmem:[#allocation8 + $0x24] sm:$0xf]
    %v859 = vld [vmem:[#allocation8 + $0x28] sm:$0xf]
    %v860 = vld [vmem:[#allocation8 + $0x2c] sm:$0xf]
    %v861 = vld [vmem:[#allocation8 + $0x30] sm:$0xf]
    %v862 = vld [vmem:[#allocation8 + $0x34] sm:$0xf]
    %v863 = vld [vmem:[#allocation8 + $0x38] sm:$0xf]
    %v864 = vld [vmem:[#allocation8 + $0x3c] sm:$0xf]
    %v865 = vld [vmem:[#allocation8 + $0x40] sm:$0xf]
    %v866 = vld [vmem:[#allocation8 + $0x44] sm:$0xf]
    %v867 = vld [vmem:[#allocation8 + $0x48] sm:$0xf]
    %v868 = vld [vmem:[#allocation8 + $0x4c] sm:$0xf]
    %v869 = vld [vmem:[#allocation8 + $0x50] sm:$0xf]
    %v870 = vld [vmem:[#allocation8 + $0x54] sm:$0xf]
    %v871 = vld [vmem:[#allocation8 + $0x58] sm:$0xf]
    %v872 = vld [vmem:[#allocation8 + $0x5c] sm:$0xf]
    %v873 = vld [vmem:[#allocation8 + $0x60] sm:$0xf]
    %v874 = vld [vmem:[#allocation8 + $0x64] sm:$0xf]
    %v875 = vld [vmem:[#allocation8 + $0x68] sm:$0xf]
    %v876 = vld [vmem:[#allocation8 + $0x6c] sm:$0xf]
    %v877 = vld [vmem:[#allocation8 + $0x70] sm:$0xf]
    %v878 = vld [vmem:[#allocation8 + $0x74] sm:$0xf]
    %v879 = vld [vmem:[#allocation8 + $0x78] sm:$0xf]
    %v880 = vld [vmem:[#allocation8 + $0x7c] sm:$0xf]
    %v913 = vunpack.c.l.b16 %v849
    %v914 = vunpack.c.l.b16 %v850
    %v915 = vunpack.c.l.b16 %v851
    %v916 = vunpack.c.l.b16 %v852
    %v917 = vunpack.c.l.b16 %v853
    %v918 = vunpack.c.l.b16 %v854
    %v919 = vunpack.c.l.b16 %v855
    %v920 = vunpack.c.l.b16 %v856
    %v921 = vunpack.c.l.b16 %v857
    %v922 = vunpack.c.l.b16 %v858
    %v923 = vunpack.c.l.b16 %v859
    %v924 = vunpack.c.l.b16 %v860
    %v925 = vunpack.c.l.b16 %v861
    %v926 = vunpack.c.l.b16 %v862
    %v927 = vunpack.c.l.b16 %v863
    %v928 = vunpack.c.l.b16 %v864
    %v929 = vunpack.c.l.b16 %v865
    %v930 = vunpack.c.l.b16 %v866
    %v931 = vunpack.c.l.b16 %v867
    %v932 = vunpack.c.l.b16 %v868
    %v933 = vunpack.c.l.b16 %v869
    %v934 = vunpack.c.l.b16 %v870
    %v935 = vunpack.c.l.b16 %v871
    %v936 = vunpack.c.l.b16 %v872
    %v937 = vunpack.c.l.b16 %v873
    %v938 = vunpack.c.l.b16 %v874
    %v939 = vunpack.c.l.b16 %v875
    %v940 = vunpack.c.l.b16 %v876
    %v941 = vunpack.c.l.b16 %v877
    %v942 = vunpack.c.l.b16 %v878
    %v943 = vunpack.c.l.b16 %v879
    %v944 = vunpack.c.l.b16 %v880
    %v945 = vpack.c.b16 %v914, %v913
    %v946 = vpack.c.b16 %v916, %v915
    %v947 = vpack.c.b16 %v918, %v917
    %v948 = vpack.c.b16 %v920, %v919
    %v949 = vpack.c.b16 %v922, %v921
    %v950 = vpack.c.b16 %v924, %v923
    %v951 = vpack.c.b16 %v926, %v925
    %v952 = vpack.c.b16 %v928, %v927
    %v953 = vpack.c.b16 %v930, %v929
    %v954 = vpack.c.b16 %v932, %v931
    %v955 = vpack.c.b16 %v934, %v933
    %v956 = vpack.c.b16 %v936, %v935
    %v957 = vpack.c.b16 %v938, %v937
    %v958 = vpack.c.b16 %v940, %v939
    %v959 = vpack.c.b16 %v942, %v941
    %v960 = vpack.c.b16 %v944, %v943
    %977 = vmatprep.subr.bf16.mxu0 0
    %978 = vmatpush1.bf16.msra.mxu0 %v945
    %979 = vmatprep.subr.bf16.mxu0 0
    %980 = vmatpush1.bf16.msra.mxu0 %v946
    %981 = vmatprep.subr.bf16.mxu0 0
    %982 = vmatpush1.bf16.msra.mxu0 %v947
    %983 = vmatprep.subr.bf16.mxu0 0
    %984 = vmatpush1.bf16.msra.mxu0 %v948
    %985 = vmatprep.subr.bf16.mxu0 0
    %986 = vmatpush1.bf16.msra.mxu0 %v949
    %987 = vmatprep.subr.bf16.mxu0 0
    %988 = vmatpush1.bf16.msra.mxu0 %v950
    %989 = vmatprep.subr.bf16.mxu0 0
    %990 = vmatpush1.bf16.msra.mxu0 %v951
    %991 = vmatprep.subr.bf16.mxu0 0
    %992 = vmatpush1.bf16.msra.mxu0 %v952
    %993 = vmatprep.subr.bf16.mxu0 0
    %994 = vmatpush1.bf16.msra.mxu0 %v953
    %995 = vmatprep.subr.bf16.mxu0 0
    %996 = vmatpush1.bf16.msra.mxu0 %v954
    %997 = vmatprep.subr.bf16.mxu0 0
    %998 = vmatpush1.bf16.msra.mxu0 %v955
    %999 = vmatprep.subr.bf16.mxu0 0
    %1000 = vmatpush1.bf16.msra.mxu0 %v956
    %1001 = vmatprep.subr.bf16.mxu0 0
    %1002 = vmatpush1.bf16.msra.mxu0 %v957
    %1003 = vmatprep.subr.bf16.mxu0 0
    %1004 = vmatpush1.bf16.msra.mxu0 %v958
    %1005 = vmatprep.subr.bf16.mxu0 0
    %1006 = vmatpush1.bf16.msra.mxu0 %v959
    %1007 = vmatprep.subr.bf16.mxu0 0
    %1008 = vmatpush1.bf16.msra.mxu0 %v960
    %1009 = vmatprep.mubr.bf16.mxu0 %v834
    %1010 = vmatmul.mubr.bf16.gmra.mrb[0].mxu0 %v833
    %v1011 = vpop.f32.mrb[0].mxu0
    %v1012 = vadd.f32 0.0, %v1011
    %v1013 = vpop.f32.mrb[0].mxu0
    %v1014 = vpop.f32.mrb[0].mxu0
    %v1015 = vadd.f32 0.0, %v1014
    %v1016 = vpop.f32.mrb[0].mxu0
    %1017 = vmatprep.mubr.bf16.mxu0 %v836
    %1018 = vmatmul.mubr.bf16.gmra.mrb[0].mxu0 %v835
    %v1019 = vpop.f32.mrb[0].mxu0
    %v1020 = vadd.f32 0.0, %v1019
    %v1021 = vpop.f32.mrb[0].mxu0
    %v1022 = vpop.f32.mrb[0].mxu0
    %v1023 = vadd.f32 0.0, %v1022
    %v1024 = vpop.f32.mrb[0].mxu0
    %1025 = vmatprep.mubr.bf16.mxu0 %v838
    %1026 = vmatmul.mubr.bf16.gmra.mrb[0].mxu0 %v837
    %v1027 = vpop.f32.mrb[0].mxu0
    %v1028 = vadd.f32 0.0, %v1027
    %v1029 = vpop.f32.mrb[0].mxu0
    %v1030 = vpop.f32.mrb[0].mxu0
    %v1031 = vadd.f32 0.0, %v1030
    %v1032 = vpop.f32.mrb[0].mxu0
    %1033 = vmatprep.mubr.bf16.mxu0 %v840
    %1034 = vmatmul.mubr.bf16.gmra.mrb[0].mxu0 %v839
    %v1035 = vpop.f32.mrb[0].mxu0
    %v1036 = vadd.f32 0.0, %v1035
    %v1037 = vpop.f32.mrb[0].mxu0
    %v1038 = vpop.f32.mrb[0].mxu0
    %v1039 = vadd.f32 0.0, %v1038
    %v1040 = vpop.f32.mrb[0].mxu0
    %1041 = vmatprep.mubr.bf16.mxu0 %v842
    %1042 = vmatmul.mubr.bf16.gmra.mrb[0].mxu0 %v841
    %v1043 = vpop.f32.mrb[0].mxu0
    %v1044 = vadd.f32 0.0, %v1043
    %v1045 = vpop.f32.mrb[0].mxu0
    %v1046 = vpop.f32.mrb[0].mxu0
    %v1047 = vadd.f32 0.0, %v1046
    %v1048 = vpop.f32.mrb[0].mxu0
    %1049 = vmatprep.mubr.bf16.mxu0 %v844
    %1050 = vmatmul.mubr.bf16.gmra.mrb[0].mxu0 %v843
    %v1051 = vpop.f32.mrb[0].mxu0
    %v1052 = vadd.f32 0.0, %v1051
    %v1053 = vpop.f32.mrb[0].mxu0
    %v1054 = vpop.f32.mrb[0].mxu0
    %v1055 = vadd.f32 0.0, %v1054
    %v1056 = vpop.f32.mrb[0].mxu0
    %1057 = vmatprep.mubr.bf16.mxu0 %v846
    %1058 = vmatmul.mubr.bf16.gmra.mrb[0].mxu0 %v845
    %v1059 = vpop.f32.mrb[0].mxu0
    %v1060 = vadd.f32 0.0, %v1059
    %v1061 = vpop.f32.mrb[0].mxu0
    %v1062 = vpop.f32.mrb[0].mxu0
    %v1063 = vadd.f32 0.0, %v1062
    %v1064 = vpop.f32.mrb[0].mxu0
    %1065 = vmatprep.mubr.bf16.mxu0 %v848
    %1066 = vmatmul.mubr.bf16.gmra.mrb[0].mxu0 %v847
    %v1067 = vpop.f32.mrb[0].mxu0
    %v1068 = vadd.f32 0.0, %v1067
    %v1069 = vpop.f32.mrb[0].mxu0
    %v1070 = vpop.f32.mrb[0].mxu0
    %v1071 = vadd.f32 0.0, %v1070
    %v1072 = vpop.f32.mrb[0].mxu0
    %1073 = vdwg.mxu0
    %v1074 = vpack.c.bf16 %v1015, %v1012
    %v1075 = vpack.c.bf16 %v1023, %v1020
    %v1076 = vpack.c.bf16 %v1031, %v1028
    %v1077 = vpack.c.bf16 %v1039, %v1036
    %v1078 = vpack.c.bf16 %v1047, %v1044
    %v1079 = vpack.c.bf16 %v1055, %v1052
    %v1080 = vpack.c.bf16 %v1063, %v1060
    %v1081 = vpack.c.bf16 %v1071, %v1068
    %v1082 = vld [vmem:[%s5] sm:$0x1]
    %v1084 = vlaneseq
    %v1085 = vshrl.u32 %v1084, 7
    %v1086 = vsub.s32 0, %v1085
    %v1087 = vrot.slane %v1082, %v1086
    %1089 = vmatprep.subr.bf16.mxu0 0
    %1090 = vmatpush1.bf16.msra.mxu0 %v1074
    %1091 = vmatprep.subr.bf16.mxu0 0
    %1092 = vmatpush1.bf16.msra.mxu0 %v1075
    %1093 = vmatprep.subr.bf16.mxu0 0
    %1094 = vmatpush1.bf16.msra.mxu0 %v1076
    %1095 = vmatprep.subr.bf16.mxu0 0
    %1096 = vmatpush1.bf16.msra.mxu0 %v1077
    %1097 = vmatprep.subr.bf16.mxu0 0
    %1098 = vmatpush1.bf16.msra.mxu0 %v1078
    %1099 = vmatprep.subr.bf16.mxu0 0
    %1100 = vmatpush1.bf16.msra.mxu0 %v1079
    %1101 = vmatprep.subr.bf16.mxu0 0
    %1102 = vmatpush1.bf16.msra.mxu0 %v1080
    %1103 = vmatprep.subr.bf16.mxu0 0
    %1104 = vmatpush1.bf16.msra.mxu0 %v1081
    %1105 = vmatprep.subr.bf16.mxu0 0
    %1106 = vmatpush1.bf16.msra.mxu0 0
    %1107 = vmatprep.subr.bf16.mxu0 0
    %1108 = vmatpush1.bf16.msra.mxu0 0
    %1109 = vmatprep.subr.bf16.mxu0 0
    %1110 = vmatpush1.bf16.msra.mxu0 0
    %1111 = vmatprep.subr.bf16.mxu0 0
    %1112 = vmatpush1.bf16.msra.mxu0 0
    %1113 = vmatprep.subr.bf16.mxu0 0
    %1114 = vmatpush1.bf16.msra.mxu0 0
    %1115 = vmatprep.subr.bf16.mxu0 0
    %1116 = vmatpush1.bf16.msra.mxu0 0
    %1117 = vmatprep.subr.bf16.mxu0 0
    %1118 = vmatpush1.bf16.msra.mxu0 0
    %1119 = vmatprep.subr.bf16.mxu0 0
    %1120 = vmatpush1.bf16.msra.mxu0 0
    %1121 = vmatprep.mubr.bf16.mxu0 0
    %1122 = vmatmul.mubr.bf16.gmra.mrb[0].mxu0 %v448
    %v1123 = vpop.f32.mrb[0].mxu0
    %v1124 = vadd.f32 %v1087, %v1123
    %v1125 = vpop.f32.mrb[0].mxu0
    %v1126 = vpop.f32.mrb[0].mxu0
    %v1127 = vadd.f32 %v1087, %v1126
    %v1128 = vpop.f32.mrb[0].mxu0
    %1129 = vmatprep.mubr.bf16.mxu0 0
    %1130 = vmatmul.mubr.bf16.gmra.mrb[0].mxu0 %v449
    %v1131 = vpop.f32.mrb[0].mxu0
    %v1132 = vadd.f32 %v1087, %v1131
    %v1133 = vpop.f32.mrb[0].mxu0
    %v1134 = vpop.f32.mrb[0].mxu0
    %v1135 = vadd.f32 %v1087, %v1134
    %v1136 = vpop.f32.mrb[0].mxu0
    %1137 = vmatprep.mubr.bf16.mxu0 0
    %1138 = vmatmul.mubr.bf16.gmra.mrb[0].mxu0 %v450
    %v1139 = vpop.f32.mrb[0].mxu0
    %v1140 = vadd.f32 %v1087, %v1139
    %v1141 = vpop.f32.mrb[0].mxu0
    %v1142 = vpop.f32.mrb[0].mxu0
    %v1143 = vadd.f32 %v1087, %v1142
    %v1144 = vpop.f32.mrb[0].mxu0
    %1145 = vmatprep.mubr.bf16.mxu0 0
    %1146 = vmatmul.mubr.bf16.gmra.mrb[0].mxu0 %v451
    %v1147 = vpop.f32.mrb[0].mxu0
    %v1148 = vadd.f32 %v1087, %v1147
    %v1149 = vpop.f32.mrb[0].mxu0
    %v1150 = vpop.f32.mrb[0].mxu0
    %v1151 = vadd.f32 %v1087, %v1150
    %v1152 = vpop.f32.mrb[0].mxu0
    %1153 = vmatprep.mubr.bf16.mxu0 0
    %1154 = vmatmul.mubr.bf16.gmra.mrb[0].mxu0 %v452
    %v1155 = vpop.f32.mrb[0].mxu0
    %v1156 = vadd.f32 %v1087, %v1155
    %v1157 = vpop.f32.mrb[0].mxu0
    %v1158 = vpop.f32.mrb[0].mxu0
    %v1159 = vadd.f32 %v1087, %v1158
    %v1160 = vpop.f32.mrb[0].mxu0
    %1161 = vmatprep.mubr.bf16.mxu0 0
    %1162 = vmatmul.mubr.bf16.gmra.mrb[0].mxu0 %v453
    %v1163 = vpop.f32.mrb[0].mxu0
    %v1164 = vadd.f32 %v1087, %v1163
    %v1165 = vpop.f32.mrb[0].mxu0
    %v1166 = vpop.f32.mrb[0].mxu0
    %v1167 = vadd.f32 %v1087, %v1166
    %v1168 = vpop.f32.mrb[0].mxu0
    %1169 = vmatprep.mubr.bf16.mxu0 0
    %1170 = vmatmul.mubr.bf16.gmra.mrb[0].mxu0 %v454
    %v1171 = vpop.f32.mrb[0].mxu0
    %v1172 = vadd.f32 %v1087, %v1171
    %v1173 = vpop.f32.mrb[0].mxu0
    %v1174 = vpop.f32.mrb[0].mxu0
    %v1175 = vadd.f32 %v1087, %v1174
    %v1176 = vpop.f32.mrb[0].mxu0
    %1177 = vmatprep.mubr.bf16.mxu0 0
    %1178 = vmatmul.mubr.bf16.gmra.mrb[0].mxu0 %v455
    %v1179 = vpop.f32.mrb[0].mxu0
    %v1180 = vadd.f32 %v1087, %v1179
    %v1181 = vpop.f32.mrb[0].mxu0
    %v1182 = vpop.f32.mrb[0].mxu0
    %v1183 = vadd.f32 %v1087, %v1182
    %v1184 = vpop.f32.mrb[0].mxu0
    %1185 = vdwg.mxu0
    %vm1186 = vcmp.gt.f32.partialorder %v1124, 0.0
    %vm1187 = vcmp.gt.f32.partialorder %v1127, 0.0
    %vm1188 = vcmp.gt.f32.partialorder %v1132, 0.0
    %vm1189 = vcmp.gt.f32.partialorder %v1135, 0.0
    %vm1190 = vcmp.gt.f32.partialorder %v1140, 0.0
    %vm1191 = vcmp.gt.f32.partialorder %v1143, 0.0
    %vm1192 = vcmp.gt.f32.partialorder %v1148, 0.0
    %vm1193 = vcmp.gt.f32.partialorder %v1151, 0.0
    %vm1194 = vcmp.gt.f32.partialorder %v1156, 0.0
    %vm1195 = vcmp.gt.f32.partialorder %v1159, 0.0
    %vm1196 = vcmp.gt.f32.partialorder %v1164, 0.0
    %vm1197 = vcmp.gt.f32.partialorder %v1167, 0.0
    %vm1198 = vcmp.gt.f32.partialorder %v1172, 0.0
    %vm1199 = vcmp.gt.f32.partialorder %v1175, 0.0
    %vm1200 = vcmp.gt.f32.partialorder %v1180, 0.0
    %vm1201 = vcmp.gt.f32.partialorder %v1183, 0.0
    %v1202 = vmin.f32 %v1124, 0.0
    %v1203 = vmin.f32 %v1127, 0.0
    %v1204 = vmin.f32 %v1132, 0.0
    %v1205 = vmin.f32 %v1135, 0.0
    %v1206 = vmin.f32 %v1140, 0.0
    %v1207 = vmin.f32 %v1143, 0.0
    %v1208 = vmin.f32 %v1148, 0.0
    %v1209 = vmin.f32 %v1151, 0.0
    %v1210 = vmin.f32 %v1156, 0.0
    %v1211 = vmin.f32 %v1159, 0.0
    %v1212 = vmin.f32 %v1164, 0.0
    %v1213 = vmin.f32 %v1167, 0.0
    %v1214 = vmin.f32 %v1172, 0.0
    %v1215 = vmin.f32 %v1175, 0.0
    %v1216 = vmin.f32 %v1180, 0.0
    %v1217 = vmin.f32 %v1183, 0.0
    %v1218 = vmul.f32 %v1202, 1.442695
    %v1219 = vpow.pop %v1218
    %v1220 = vmul.f32 %v1203, 1.442695
    %v1221 = vpow.pop %v1220
    %v1222 = vmul.f32 %v1204, 1.442695
    %v1223 = vpow.pop %v1222
    %v1224 = vmul.f32 %v1205, 1.442695
    %v1225 = vpow.pop %v1224
    %v1226 = vmul.f32 %v1206, 1.442695
    %v1227 = vpow.pop %v1226
    %v1228 = vmul.f32 %v1207, 1.442695
    %v1229 = vpow.pop %v1228
    %v1230 = vmul.f32 %v1208, 1.442695
    %v1231 = vpow.pop %v1230
    %v1232 = vmul.f32 %v1209, 1.442695
    %v1233 = vpow.pop %v1232
    %v1234 = vmul.f32 %v1210, 1.442695
    %v1235 = vpow.pop %v1234
    %v1236 = vmul.f32 %v1211, 1.442695
    %v1237 = vpow.pop %v1236
    %v1238 = vmul.f32 %v1212, 1.442695
    %v1239 = vpow.pop %v1238
    %v1240 = vmul.f32 %v1213, 1.442695
    %v1241 = vpow.pop %v1240
    %v1242 = vmul.f32 %v1214, 1.442695
    %v1243 = vpow.pop %v1242
    %v1244 = vmul.f32 %v1215, 1.442695
    %v1245 = vpow.pop %v1244
    %v1246 = vmul.f32 %v1216, 1.442695
    %v1247 = vpow.pop %v1246
    %v1248 = vmul.f32 %v1217, 1.442695
    %v1249 = vpow.pop %v1248
    %v1250 = vsub.f32 %v1219, 1.0
    %v1251 = vsub.f32 %v1221, 1.0
    %v1252 = vsub.f32 %v1223, 1.0
    %v1253 = vsub.f32 %v1225, 1.0
    %v1254 = vsub.f32 %v1227, 1.0
    %v1255 = vsub.f32 %v1229, 1.0
    %v1256 = vsub.f32 %v1231, 1.0
    %v1257 = vsub.f32 %v1233, 1.0
    %v1258 = vsub.f32 %v1235, 1.0
    %v1259 = vsub.f32 %v1237, 1.0
    %v1260 = vsub.f32 %v1239, 1.0
    %v1261 = vsub.f32 %v1241, 1.0
    %v1262 = vsub.f32 %v1243, 1.0
    %v1263 = vsub.f32 %v1245, 1.0
    %v1264 = vsub.f32 %v1247, 1.0
    %v1265 = vsub.f32 %v1249, 1.0
    %v1266 = vmul.f32 %v1250, 1.6732632
    %v1267 = vmul.f32 %v1251, 1.6732632
    %v1268 = vmul.f32 %v1252, 1.6732632
    %v1269 = vmul.f32 %v1253, 1.6732632
    %v1270 = vmul.f32 %v1254, 1.6732632
    %v1271 = vmul.f32 %v1255, 1.6732632
    %v1272 = vmul.f32 %v1256, 1.6732632
    %v1273 = vmul.f32 %v1257, 1.6732632
    %v1274 = vmul.f32 %v1258, 1.6732632
    %v1275 = vmul.f32 %v1259, 1.6732632
    %v1276 = vmul.f32 %v1260, 1.6732632
    %v1277 = vmul.f32 %v1261, 1.6732632
    %v1278 = vmul.f32 %v1262, 1.6732632
    %v1279 = vmul.f32 %v1263, 1.6732632
    %v1280 = vmul.f32 %v1264, 1.6732632
    %v1281 = vmul.f32 %v1265, 1.6732632
    %v1282 = vsel %vm1186, %v1124, %v1266
    %v1283 = vsel %vm1187, %v1127, %v1267
    %v1284 = vsel %vm1188, %v1132, %v1268
    %v1285 = vsel %vm1189, %v1135, %v1269
    %v1286 = vsel %vm1190, %v1140, %v1270
    %v1287 = vsel %vm1191, %v1143, %v1271
    %v1288 = vsel %vm1192, %v1148, %v1272
    %v1289 = vsel %vm1193, %v1151, %v1273
    %v1290 = vsel %vm1194, %v1156, %v1274
    %v1291 = vsel %vm1195, %v1159, %v1275
    %v1292 = vsel %vm1196, %v1164, %v1276
    %v1293 = vsel %vm1197, %v1167, %v1277
    %v1294 = vsel %vm1198, %v1172, %v1278
    %v1295 = vsel %vm1199, %v1175, %v1279
    %v1296 = vsel %vm1200, %v1180, %v1280
    %v1297 = vsel %vm1201, %v1183, %v1281
    %v1298 = vmul.f32 %v1282, 1.050701
    %v1299 = vmul.f32 %v1283, 1.050701
    %v1300 = vmul.f32 %v1284, 1.050701
    %v1301 = vmul.f32 %v1285, 1.050701
    %v1302 = vmul.f32 %v1286, 1.050701
    %v1303 = vmul.f32 %v1287, 1.050701
    %v1304 = vmul.f32 %v1288, 1.050701
    %v1305 = vmul.f32 %v1289, 1.050701
    %v1306 = vmul.f32 %v1290, 1.050701
    %v1307 = vmul.f32 %v1291, 1.050701
    %v1308 = vmul.f32 %v1292, 1.050701
    %v1309 = vmul.f32 %v1293, 1.050701
    %v1310 = vmul.f32 %v1294, 1.050701
    %v1311 = vmul.f32 %v1295, 1.050701
    %v1312 = vmul.f32 %v1296, 1.050701
    %v1313 = vmul.f32 %v1297, 1.050701
    %v1314 = vpack.c.bf16 %v1299, %v1298
    %v1315 = vpack.c.bf16 %v1301, %v1300
    %v1316 = vpack.c.bf16 %v1303, %v1302
    %v1317 = vpack.c.bf16 %v1305, %v1304
    %v1318 = vpack.c.bf16 %v1307, %v1306
    %v1319 = vpack.c.bf16 %v1309, %v1308
    %v1320 = vpack.c.bf16 %v1311, %v1310
    %v1321 = vpack.c.bf16 %v1313, %v1312
    %v1322 = vld [vmem:[#allocation10] sm:$0xf]
    %v1323 = vld [vmem:[#allocation10 + $0x4] sm:$0xf]
    %v1324 = vld [vmem:[#allocation10 + $0x8] sm:$0xf]
    %v1325 = vld [vmem:[#allocation10 + $0xc] sm:$0xf]
    %v1326 = vld [vmem:[#allocation10 + $0x10] sm:$0xf]
    %v1327 = vld [vmem:[#allocation10 + $0x14] sm:$0xf]
    %v1328 = vld [vmem:[#allocation10 + $0x18] sm:$0xf]
    %v1329 = vld [vmem:[#allocation10 + $0x1c] sm:$0xf]
    %v1330 = vld [vmem:[#allocation10 + $0x20] sm:$0xf]
    %v1331 = vld [vmem:[#allocation10 + $0x24] sm:$0xf]
    %v1332 = vld [vmem:[#allocation10 + $0x28] sm:$0xf]
    %v1333 = vld [vmem:[#allocation10 + $0x2c] sm:$0xf]
    %v1334 = vld [vmem:[#allocation10 + $0x30] sm:$0xf]
    %v1335 = vld [vmem:[#allocation10 + $0x34] sm:$0xf]
    %v1336 = vld [vmem:[#allocation10 + $0x38] sm:$0xf]
    %v1337 = vld [vmem:[#allocation10 + $0x3c] sm:$0xf]
    %v1354 = vunpack.c.l.b16 %v1322
    %v1355 = vunpack.c.l.b16 %v1323
    %v1356 = vunpack.c.l.b16 %v1324
    %v1357 = vunpack.c.l.b16 %v1325
    %v1358 = vunpack.c.l.b16 %v1326
    %v1359 = vunpack.c.l.b16 %v1327
    %v1360 = vunpack.c.l.b16 %v1328
    %v1361 = vunpack.c.l.b16 %v1329
    %v1362 = vunpack.c.l.b16 %v1330
    %v1363 = vunpack.c.l.b16 %v1331
    %v1364 = vunpack.c.l.b16 %v1332
    %v1365 = vunpack.c.l.b16 %v1333
    %v1366 = vunpack.c.l.b16 %v1334
    %v1367 = vunpack.c.l.b16 %v1335
    %v1368 = vunpack.c.l.b16 %v1336
    %v1369 = vunpack.c.l.b16 %v1337
    %v1370 = vpack.c.b16 %v1355, %v1354
    %v1371 = vpack.c.b16 %v1357, %v1356
    %v1372 = vpack.c.b16 %v1359, %v1358
    %v1373 = vpack.c.b16 %v1361, %v1360
    %v1374 = vpack.c.b16 %v1363, %v1362
    %v1375 = vpack.c.b16 %v1365, %v1364
    %v1376 = vpack.c.b16 %v1367, %v1366
    %v1377 = vpack.c.b16 %v1369, %v1368
    %1386 = vmatprep.subr.bf16.mxu0 0
    %1387 = vmatpush1.bf16.msra.mxu0 %v1370
    %1388 = vmatprep.subr.bf16.mxu0 0
    %1389 = vmatpush1.bf16.msra.mxu0 %v1371
    %1390 = vmatprep.subr.bf16.mxu0 0
    %1391 = vmatpush1.bf16.msra.mxu0 %v1372
    %1392 = vmatprep.subr.bf16.mxu0 0
    %1393 = vmatpush1.bf16.msra.mxu0 %v1373
    %1394 = vmatprep.subr.bf16.mxu0 0
    %1395 = vmatpush1.bf16.msra.mxu0 %v1374
    %1396 = vmatprep.subr.bf16.mxu0 0
    %1397 = vmatpush1.bf16.msra.mxu0 %v1375
    %1398 = vmatprep.subr.bf16.mxu0 0
    %1399 = vmatpush1.bf16.msra.mxu0 %v1376
    %1400 = vmatprep.subr.bf16.mxu0 0
    %1401 = vmatpush1.bf16.msra.mxu0 %v1377
    %1402 = vmatprep.subr.bf16.mxu0 0
    %1403 = vmatpush1.bf16.msra.mxu0 0
    %1404 = vmatprep.subr.bf16.mxu0 0
    %1405 = vmatpush1.bf16.msra.mxu0 0
    %1406 = vmatprep.subr.bf16.mxu0 0
    %1407 = vmatpush1.bf16.msra.mxu0 0
    %1408 = vmatprep.subr.bf16.mxu0 0
    %1409 = vmatpush1.bf16.msra.mxu0 0
    %1410 = vmatprep.subr.bf16.mxu0 0
    %1411 = vmatpush1.bf16.msra.mxu0 0
    %1412 = vmatprep.subr.bf16.mxu0 0
    %1413 = vmatpush1.bf16.msra.mxu0 0
    %1414 = vmatprep.subr.bf16.mxu0 0
    %1415 = vmatpush1.bf16.msra.mxu0 0
    %1416 = vmatprep.subr.bf16.mxu0 0
    %1417 = vmatpush1.bf16.msra.mxu0 0
    %1418 = vmatprep.mubr.bf16.mxu0 0
    %1419 = vmatmul.mubr.bf16.gmra.mrb[0].mxu0 %v1314
    %v1420 = vpop.f32.mrb[0].mxu0
    %v1421 = vadd.f32 0.0, %v1420
    %v1422 = vpop.f32.mrb[0].mxu0
    %v1423 = vpop.f32.mrb[0].mxu0
    %v1424 = vadd.f32 0.0, %v1423
    %v1425 = vpop.f32.mrb[0].mxu0
    %1426 = vmatprep.mubr.bf16.mxu0 0
    %1427 = vmatmul.mubr.bf16.gmra.mrb[0].mxu0 %v1315
    %v1428 = vpop.f32.mrb[0].mxu0
    %v1429 = vadd.f32 0.0, %v1428
    %v1430 = vpop.f32.mrb[0].mxu0
    %v1431 = vpop.f32.mrb[0].mxu0
    %v1432 = vadd.f32 0.0, %v1431
    %v1433 = vpop.f32.mrb[0].mxu0
    %1434 = vmatprep.mubr.bf16.mxu0 0
    %1435 = vmatmul.mubr.bf16.gmra.mrb[0].mxu0 %v1316
    %v1436 = vpop.f32.mrb[0].mxu0
    %v1437 = vadd.f32 0.0, %v1436
    %v1438 = vpop.f32.mrb[0].mxu0
    %v1439 = vpop.f32.mrb[0].mxu0
    %v1440 = vadd.f32 0.0, %v1439
    %v1441 = vpop.f32.mrb[0].mxu0
    %1442 = vmatprep.mubr.bf16.mxu0 0
    %1443 = vmatmul.mubr.bf16.gmra.mrb[0].mxu0 %v1317
    %v1444 = vpop.f32.mrb[0].mxu0
    %v1445 = vadd.f32 0.0, %v1444
    %v1446 = vpop.f32.mrb[0].mxu0
    %v1447 = vpop.f32.mrb[0].mxu0
    %v1448 = vadd.f32 0.0, %v1447
    %v1449 = vpop.f32.mrb[0].mxu0
    %1450 = vmatprep.mubr.bf16.mxu0 0
    %1451 = vmatmul.mubr.bf16.gmra.mrb[0].mxu0 %v1318
    %v1452 = vpop.f32.mrb[0].mxu0
    %v1453 = vadd.f32 0.0, %v1452
    %v1454 = vpop.f32.mrb[0].mxu0
    %v1455 = vpop.f32.mrb[0].mxu0
    %v1456 = vadd.f32 0.0, %v1455
    %v1457 = vpop.f32.mrb[0].mxu0
    %1458 = vmatprep.mubr.bf16.mxu0 0
    %1459 = vmatmul.mubr.bf16.gmra.mrb[0].mxu0 %v1319
    %v1460 = vpop.f32.mrb[0].mxu0
    %v1461 = vadd.f32 0.0, %v1460
    %v1462 = vpop.f32.mrb[0].mxu0
    %v1463 = vpop.f32.mrb[0].mxu0
    %v1464 = vadd.f32 0.0, %v1463
    %v1465 = vpop.f32.mrb[0].mxu0
    %1466 = vmatprep.mubr.bf16.mxu0 0
    %1467 = vmatmul.mubr.bf16.gmra.mrb[0].mxu0 %v1320
    %v1468 = vpop.f32.mrb[0].mxu0
    %v1469 = vadd.f32 0.0, %v1468
    %v1470 = vpop.f32.mrb[0].mxu0
    %v1471 = vpop.f32.mrb[0].mxu0
    %v1472 = vadd.f32 0.0, %v1471
    %v1473 = vpop.f32.mrb[0].mxu0
    %1474 = vmatprep.mubr.bf16.mxu0 0
    %1475 = vmatmul.mubr.bf16.gmra.mrb[0].mxu0 %v1321
    %v1476 = vpop.f32.mrb[0].mxu0
    %v1477 = vadd.f32 0.0, %v1476
    %v1478 = vpop.f32.mrb[0].mxu0
    %v1479 = vpop.f32.mrb[0].mxu0
    %v1480 = vadd.f32 0.0, %v1479
    %v1481 = vpop.f32.mrb[0].mxu0
    %1482 = vdwg.mxu0
    %v1483 = vpack.c.bf16 %v1424, %v1421
    %v1484 = vpack.c.bf16 %v1432, %v1429
    %v1485 = vpack.c.bf16 %v1440, %v1437
    %v1486 = vpack.c.bf16 %v1448, %v1445
    %v1487 = vpack.c.bf16 %v1456, %v1453
    %v1488 = vpack.c.bf16 %v1464, %v1461
    %v1489 = vpack.c.bf16 %v1472, %v1469
    %v1490 = vpack.c.bf16 %v1480, %v1477
    %v1491 = vld [vmem:[%s7] sm:$0x1]
    %v1493 = vlaneseq
    %v1494 = vshrl.u32 %v1493, 7
    %v1495 = vsub.s32 0, %v1494
    %v1496 = vrot.slane %v1491, %v1495
    %1498 = vmatprep.subr.bf16.mxu0 0
    %1499 = vmatpush1.bf16.msra.mxu0 %v1483
    %1500 = vmatprep.subr.bf16.mxu0 0
    %1501 = vmatpush1.bf16.msra.mxu0 %v1484
    %1502 = vmatprep.subr.bf16.mxu0 0
    %1503 = vmatpush1.bf16.msra.mxu0 %v1485
    %1504 = vmatprep.subr.bf16.mxu0 0
    %1505 = vmatpush1.bf16.msra.mxu0 %v1486
    %1506 = vmatprep.subr.bf16.mxu0 0
    %1507 = vmatpush1.bf16.msra.mxu0 %v1487
    %1508 = vmatprep.subr.bf16.mxu0 0
    %1509 = vmatpush1.bf16.msra.mxu0 %v1488
    %1510 = vmatprep.subr.bf16.mxu0 0
    %1511 = vmatpush1.bf16.msra.mxu0 %v1489
    %1512 = vmatprep.subr.bf16.mxu0 0
    %1513 = vmatpush1.bf16.msra.mxu0 %v1490
    %1514 = vmatprep.subr.bf16.mxu0 0
    %1515 = vmatpush1.bf16.msra.mxu0 0
    %1516 = vmatprep.subr.bf16.mxu0 0
    %1517 = vmatpush1.bf16.msra.mxu0 0
    %1518 = vmatprep.subr.bf16.mxu0 0
    %1519 = vmatpush1.bf16.msra.mxu0 0
    %1520 = vmatprep.subr.bf16.mxu0 0
    %1521 = vmatpush1.bf16.msra.mxu0 0
    %1522 = vmatprep.subr.bf16.mxu0 0
    %1523 = vmatpush1.bf16.msra.mxu0 0
    %1524 = vmatprep.subr.bf16.mxu0 0
    %1525 = vmatpush1.bf16.msra.mxu0 0
    %1526 = vmatprep.subr.bf16.mxu0 0
    %1527 = vmatpush1.bf16.msra.mxu0 0
    %1528 = vmatprep.subr.bf16.mxu0 0
    %1529 = vmatpush1.bf16.msra.mxu0 0
    %1530 = vmatprep.mubr.bf16.mxu0 0
    %1531 = vmatmul.mubr.bf16.gmra.mrb[0].mxu0 %v448
    %v1532 = vpop.f32.mrb[0].mxu0
    %v1533 = vadd.f32 %v1496, %v1532
    %v1534 = vpop.f32.mrb[0].mxu0
    %v1535 = vpop.f32.mrb[0].mxu0
    %v1536 = vadd.f32 %v1496, %v1535
    %v1537 = vpop.f32.mrb[0].mxu0
    %1538 = vmatprep.mubr.bf16.mxu0 0
    %1539 = vmatmul.mubr.bf16.gmra.mrb[0].mxu0 %v449
    %v1540 = vpop.f32.mrb[0].mxu0
    %v1541 = vadd.f32 %v1496, %v1540
    %v1542 = vpop.f32.mrb[0].mxu0
    %v1543 = vpop.f32.mrb[0].mxu0
    %v1544 = vadd.f32 %v1496, %v1543
    %v1545 = vpop.f32.mrb[0].mxu0
    %1546 = vmatprep.mubr.bf16.mxu0 0
    %1547 = vmatmul.mubr.bf16.gmra.mrb[0].mxu0 %v450
    %v1548 = vpop.f32.mrb[0].mxu0
    %v1549 = vadd.f32 %v1496, %v1548
    %v1550 = vpop.f32.mrb[0].mxu0
    %v1551 = vpop.f32.mrb[0].mxu0
    %v1552 = vadd.f32 %v1496, %v1551
    %v1553 = vpop.f32.mrb[0].mxu0
    %1554 = vmatprep.mubr.bf16.mxu0 0
    %1555 = vmatmul.mubr.bf16.gmra.mrb[0].mxu0 %v451
    %v1556 = vpop.f32.mrb[0].mxu0
    %v1557 = vadd.f32 %v1496, %v1556
    %v1558 = vpop.f32.mrb[0].mxu0
    %v1559 = vpop.f32.mrb[0].mxu0
    %v1560 = vadd.f32 %v1496, %v1559
    %v1561 = vpop.f32.mrb[0].mxu0
    %1562 = vmatprep.mubr.bf16.mxu0 0
    %1563 = vmatmul.mubr.bf16.gmra.mrb[0].mxu0 %v452
    %v1564 = vpop.f32.mrb[0].mxu0
    %v1565 = vadd.f32 %v1496, %v1564
    %v1566 = vpop.f32.mrb[0].mxu0
    %v1567 = vpop.f32.mrb[0].mxu0
    %v1568 = vadd.f32 %v1496, %v1567
    %v1569 = vpop.f32.mrb[0].mxu0
    %1570 = vmatprep.mubr.bf16.mxu0 0
    %1571 = vmatmul.mubr.bf16.gmra.mrb[0].mxu0 %v453
    %v1572 = vpop.f32.mrb[0].mxu0
    %v1573 = vadd.f32 %v1496, %v1572
    %v1574 = vpop.f32.mrb[0].mxu0
    %v1575 = vpop.f32.mrb[0].mxu0
    %v1576 = vadd.f32 %v1496, %v1575
    %v1577 = vpop.f32.mrb[0].mxu0
    %1578 = vmatprep.mubr.bf16.mxu0 0
    %1579 = vmatmul.mubr.bf16.gmra.mrb[0].mxu0 %v454
    %v1580 = vpop.f32.mrb[0].mxu0
    %v1581 = vadd.f32 %v1496, %v1580
    %v1582 = vpop.f32.mrb[0].mxu0
    %v1583 = vpop.f32.mrb[0].mxu0
    %v1584 = vadd.f32 %v1496, %v1583
    %v1585 = vpop.f32.mrb[0].mxu0
    %1586 = vmatprep.mubr.bf16.mxu0 0
    %1587 = vmatmul.mubr.bf16.gmra.mrb[0].mxu0 %v455
    %v1588 = vpop.f32.mrb[0].mxu0
    %v1589 = vadd.f32 %v1496, %v1588
    %v1590 = vpop.f32.mrb[0].mxu0
    %v1591 = vpop.f32.mrb[0].mxu0
    %v1592 = vadd.f32 %v1496, %v1591
    %v1593 = vpop.f32.mrb[0].mxu0
    %1594 = vdwg.mxu0
    %v1595 = vlaneseq
    %v1596 = vshrl.u32 %v1595, 7
    %v1597 = vadd.s32 %v1596, 8
    %v1598 = vadd.s32 %v1596, 16
    %v1599 = vadd.s32 %v1596, 24
    %v1600 = vadd.s32 %v1596, 32
    %v1601 = vadd.s32 %v1596, 40
    %v1602 = vadd.s32 %v1596, 48
    %v1603 = vadd.s32 %v1596, 56
    %v1604 = vadd.s32 %v1596, 64
    %v1605 = vadd.s32 %v1596, 72
    %v1606 = vadd.s32 %v1596, 80
    %v1607 = vadd.s32 %v1596, 88
    %v1608 = vadd.s32 %v1596, 96
    %v1609 = vadd.s32 %v1596, 104
    %v1610 = vadd.s32 %v1596, 112
    %v1611 = vadd.s32 %v1596, 120
    %vm1612 = vcmp.lt.s32.totalorder %v1596, 12
    %vm1613 = vcmp.lt.s32.totalorder %v1597, 12
    %vm1614 = vcmp.lt.s32.totalorder %v1598, 12
    %vm1615 = vcmp.lt.s32.totalorder %v1599, 12
    %vm1616 = vcmp.lt.s32.totalorder %v1600, 12
    %vm1617 = vcmp.lt.s32.totalorder %v1601, 12
    %vm1618 = vcmp.lt.s32.totalorder %v1602, 12
    %vm1619 = vcmp.lt.s32.totalorder %v1603, 12
    %vm1620 = vcmp.lt.s32.totalorder %v1604, 12
    %vm1621 = vcmp.lt.s32.totalorder %v1605, 12
    %vm1622 = vcmp.lt.s32.totalorder %v1606, 12
    %vm1623 = vcmp.lt.s32.totalorder %v1607, 12
    %vm1624 = vcmp.lt.s32.totalorder %v1608, 12
    %vm1625 = vcmp.lt.s32.totalorder %v1609, 12
    %vm1626 = vcmp.lt.s32.totalorder %v1610, 12
    %vm1627 = vcmp.lt.s32.totalorder %v1611, 12
    %v1628 = vsel %vm1612, 1, 0
    %v1629 = vsel %vm1613, 1, 0
    %v1630 = vsel %vm1614, 1, 0
    %v1631 = vsel %vm1615, 1, 0
    %v1632 = vsel %vm1616, 1, 0
    %v1633 = vsel %vm1617, 1, 0
    %v1634 = vsel %vm1618, 1, 0
    %v1635 = vsel %vm1619, 1, 0
    %v1636 = vsel %vm1620, 1, 0
    %v1637 = vsel %vm1621, 1, 0
    %v1638 = vsel %vm1622, 1, 0
    %v1639 = vsel %vm1623, 1, 0
    %v1640 = vsel %vm1624, 1, 0
    %v1641 = vsel %vm1625, 1, 0
    %v1642 = vsel %vm1626, 1, 0
    %v1643 = vsel %vm1627, 1, 0
    %vm1644 = vcmp.eq.s32.totalorder %v1628, 1
    %vm1645 = vcmp.eq.s32.totalorder %v1629, 1
    %vm1646 = vcmp.eq.s32.totalorder %v1630, 1
    %vm1647 = vcmp.eq.s32.totalorder %v1631, 1
    %vm1648 = vcmp.eq.s32.totalorder %v1632, 1
    %vm1649 = vcmp.eq.s32.totalorder %v1633, 1
    %vm1650 = vcmp.eq.s32.totalorder %v1634, 1
    %vm1651 = vcmp.eq.s32.totalorder %v1635, 1
    %vm1652 = vcmp.eq.s32.totalorder %v1636, 1
    %vm1653 = vcmp.eq.s32.totalorder %v1637, 1
    %vm1654 = vcmp.eq.s32.totalorder %v1638, 1
    %vm1655 = vcmp.eq.s32.totalorder %v1639, 1
    %vm1656 = vcmp.eq.s32.totalorder %v1640, 1
    %vm1657 = vcmp.eq.s32.totalorder %v1641, 1
    %vm1658 = vcmp.eq.s32.totalorder %v1642, 1
    %vm1659 = vcmp.eq.s32.totalorder %v1643, 1
    %v1660 = vsel %vm1644, %v1533, 0.0
    %v1661 = vsel %vm1645, %v1536, 0.0
    %v1662 = vsel %vm1646, %v1541, 0.0
    %v1663 = vsel %vm1647, %v1544, 0.0
    %v1664 = vsel %vm1648, %v1549, 0.0
    %v1665 = vsel %vm1649, %v1552, 0.0
    %v1666 = vsel %vm1650, %v1557, 0.0
    %v1667 = vsel %vm1651, %v1560, 0.0
    %v1668 = vsel %vm1652, %v1565, 0.0
    %v1669 = vsel %vm1653, %v1568, 0.0
    %v1670 = vsel %vm1654, %v1573, 0.0
    %v1671 = vsel %vm1655, %v1576, 0.0
    %v1672 = vsel %vm1656, %v1581, 0.0
    %v1673 = vsel %vm1657, %v1584, 0.0
    %v1674 = vsel %vm1658, %v1589, 0.0
    %v1675 = vsel %vm1659, %v1592, 0.0
    %v1676 = vadd.f32 %v1660, %v1661
    %v1677 = vadd.f32 %v1676, %v1662
    %v1678 = vadd.f32 %v1677, %v1663
    %v1679 = vadd.f32 %v1678, %v1664
    %v1680 = vadd.f32 %v1679, %v1665
    %v1681 = vadd.f32 %v1680, %v1666
    %v1682 = vadd.f32 %v1681, %v1667
    %v1683 = vadd.f32 %v1682, %v1668
    %v1684 = vadd.f32 %v1683, %v1669
    %v1685 = vadd.f32 %v1684, %v1670
    %v1686 = vadd.f32 %v1685, %v1671
    %v1687 = vadd.f32 %v1686, %v1672
    %v1688 = vadd.f32 %v1687, %v1673
    %v1689 = vadd.f32 %v1688, %v1674
    %v1690 = vadd.f32 %v1689, %v1675
    %1691 = vadd.xlane.f32.xlu0 %v1690
    %v1692 = vpop.xlane.xlu0 %1691
    %v1693 = vrot.slane %v1692, 4
    %v1694 = vadd.f32 %v1692, %v1693
    %v1695 = vrot.slane %v1694, 2
    %v1696 = vadd.f32 %v1694, %v1695
    %v1697 = vrot.slane %v1696, 1
    %v1698 = vadd.f32 %v1696, %v1697
    %s1699 = vtos %v1698
    %v1700 = vstv %s1699
    %v1701 = vrcp.pop %v1700
    %v1702 = vmul.f32 1.0, %v1701
    %v1703 = vmul.f32 %v1660, %v1702
    %v1704 = vmul.f32 %v1661, %v1702
    %v1705 = vmul.f32 %v1662, %v1702
    %v1706 = vmul.f32 %v1663, %v1702
    %v1707 = vmul.f32 %v1664, %v1702
    %v1708 = vmul.f32 %v1665, %v1702
    %v1709 = vmul.f32 %v1666, %v1702
    %v1710 = vmul.f32 %v1667, %v1702
    %v1711 = vmul.f32 %v1668, %v1702
    %v1712 = vmul.f32 %v1669, %v1702
    %v1713 = vmul.f32 %v1670, %v1702
    %v1714 = vmul.f32 %v1671, %v1702
    %v1715 = vmul.f32 %v1672, %v1702
    %v1716 = vmul.f32 %v1673, %v1702
    %v1717 = vmul.f32 %v1674, %v1702
    %v1718 = vmul.f32 %v1675, %v1702
    %v1719 = vtanh.pop %v1703
    %v1720 = vtanh.pop %v1704
    %v1721 = vtanh.pop %v1705
    %v1722 = vtanh.pop %v1706
    %v1723 = vtanh.pop %v1707
    %v1724 = vtanh.pop %v1708
    %v1725 = vtanh.pop %v1709
    %v1726 = vtanh.pop %v1710
    %v1727 = vtanh.pop %v1711
    %v1728 = vtanh.pop %v1712
    %v1729 = vtanh.pop %v1713
    %v1730 = vtanh.pop %v1714
    %v1731 = vtanh.pop %v1715
    %v1732 = vtanh.pop %v1716
    %v1733 = vtanh.pop %v1717
    %v1734 = vtanh.pop %v1718
    %v1735 = vmul.f32 %v1719, %v1719
    %v1736 = vmul.f32 %v1720, %v1720
    %v1737 = vmul.f32 %v1721, %v1721
    %v1738 = vmul.f32 %v1722, %v1722
    %v1739 = vmul.f32 %v1723, %v1723
    %v1740 = vmul.f32 %v1724, %v1724
    %v1741 = vmul.f32 %v1725, %v1725
    %v1742 = vmul.f32 %v1726, %v1726
    %v1743 = vmul.f32 %v1727, %v1727
    %v1744 = vmul.f32 %v1728, %v1728
    %v1745 = vmul.f32 %v1729, %v1729
    %v1746 = vmul.f32 %v1730, %v1730
    %v1747 = vmul.f32 %v1731, %v1731
    %v1748 = vmul.f32 %v1732, %v1732
    %v1749 = vmul.f32 %v1733, %v1733
    %v1750 = vmul.f32 %v1734, %v1734
    %v1751 = vmul.f32 %v1735, %v1735
    %v1752 = vmul.f32 %v1736, %v1736
    %v1753 = vmul.f32 %v1737, %v1737
    %v1754 = vmul.f32 %v1738, %v1738
    %v1755 = vmul.f32 %v1739, %v1739
    %v1756 = vmul.f32 %v1740, %v1740
    %v1757 = vmul.f32 %v1741, %v1741
    %v1758 = vmul.f32 %v1742, %v1742
    %v1759 = vmul.f32 %v1743, %v1743
    %v1760 = vmul.f32 %v1744, %v1744
    %v1761 = vmul.f32 %v1745, %v1745
    %v1762 = vmul.f32 %v1746, %v1746
    %v1763 = vmul.f32 %v1747, %v1747
    %v1764 = vmul.f32 %v1748, %v1748
    %v1765 = vmul.f32 %v1749, %v1749
    %v1766 = vmul.f32 %v1750, %v1750
    %1767 = vadd.xlane.f32.xlu0 %v1751
    %v1768 = vpop.xlane.xlu0 %1767
    %1769 = vadd.xlane.f32.xlu0 %v1752
    %v1770 = vpop.xlane.xlu0 %1769
    %1771 = vadd.xlane.f32.xlu0 %v1753
    %v1772 = vpop.xlane.xlu0 %1771
    %1773 = vadd.xlane.f32.xlu0 %v1754
    %v1774 = vpop.xlane.xlu0 %1773
    %1775 = vadd.xlane.f32.xlu0 %v1755
    %v1776 = vpop.xlane.xlu0 %1775
    %1777 = vadd.xlane.f32.xlu0 %v1756
    %v1778 = vpop.xlane.xlu0 %1777
    %1779 = vadd.xlane.f32.xlu0 %v1757
    %v1780 = vpop.xlane.xlu0 %1779
    %1781 = vadd.xlane.f32.xlu0 %v1758
    %v1782 = vpop.xlane.xlu0 %1781
    %1783 = vadd.xlane.f32.xlu0 %v1759
    %v1784 = vpop.xlane.xlu0 %1783
    %1785 = vadd.xlane.f32.xlu0 %v1760
    %v1786 = vpop.xlane.xlu0 %1785
    %1787 = vadd.xlane.f32.xlu0 %v1761
    %v1788 = vpop.xlane.xlu0 %1787
    %1789 = vadd.xlane.f32.xlu0 %v1762
    %v1790 = vpop.xlane.xlu0 %1789
    %1791 = vadd.xlane.f32.xlu0 %v1763
    %v1792 = vpop.xlane.xlu0 %1791
    %1793 = vadd.xlane.f32.xlu0 %v1764
    %v1794 = vpop.xlane.xlu0 %1793
    %1795 = vadd.xlane.f32.xlu0 %v1765
    %v1796 = vpop.xlane.xlu0 %1795
    %1797 = vadd.xlane.f32.xlu0 %v1766
    %v1798 = vpop.xlane.xlu0 %1797
    %v1799 = vmax.f32 %v1768, 1e-24
    %v1800 = vmax.f32 %v1770, 1e-24
    %v1801 = vmax.f32 %v1772, 1e-24
    %v1802 = vmax.f32 %v1774, 1e-24
    %v1803 = vmax.f32 %v1776, 1e-24
    %v1804 = vmax.f32 %v1778, 1e-24
    %v1805 = vmax.f32 %v1780, 1e-24
    %v1806 = vmax.f32 %v1782, 1e-24
    %v1807 = vmax.f32 %v1784, 1e-24
    %v1808 = vmax.f32 %v1786, 1e-24
    %v1809 = vmax.f32 %v1788, 1e-24
    %v1810 = vmax.f32 %v1790, 1e-24
    %v1811 = vmax.f32 %v1792, 1e-24
    %v1812 = vmax.f32 %v1794, 1e-24
    %v1813 = vmax.f32 %v1796, 1e-24
    %v1814 = vmax.f32 %v1798, 1e-24
    %v1815 = vrsqrt.pop %v1799
    %v1816 = vrsqrt.pop %v1800
    %v1817 = vrsqrt.pop %v1801
    %v1818 = vrsqrt.pop %v1802
    %v1819 = vrsqrt.pop %v1803
    %v1820 = vrsqrt.pop %v1804
    %v1821 = vrsqrt.pop %v1805
    %v1822 = vrsqrt.pop %v1806
    %v1823 = vrsqrt.pop %v1807
    %v1824 = vrsqrt.pop %v1808
    %v1825 = vrsqrt.pop %v1809
    %v1826 = vrsqrt.pop %v1810
    %v1827 = vrsqrt.pop %v1811
    %v1828 = vrsqrt.pop %v1812
    %v1829 = vrsqrt.pop %v1813
    %v1830 = vrsqrt.pop %v1814
    %v1831 = vmul.f32 %v1735, %v1815
    %v1832 = vmul.f32 %v1736, %v1816
    %v1833 = vmul.f32 %v1737, %v1817
    %v1834 = vmul.f32 %v1738, %v1818
    %v1835 = vmul.f32 %v1739, %v1819
    %v1836 = vmul.f32 %v1740, %v1820
    %v1837 = vmul.f32 %v1741, %v1821
    %v1838 = vmul.f32 %v1742, %v1822
    %v1839 = vmul.f32 %v1743, %v1823
    %v1840 = vmul.f32 %v1744, %v1824
    %v1841 = vmul.f32 %v1745, %v1825
    %v1842 = vmul.f32 %v1746, %v1826
    %v1843 = vmul.f32 %v1747, %v1827
    %v1844 = vmul.f32 %v1748, %v1828
    %v1845 = vmul.f32 %v1749, %v1829
    %v1846 = vmul.f32 %v1750, %v1830
    %1847 = vst [vmem:[#allocation11] sm:$0xff] %v1831
    %1848 = vst [vmem:[#allocation11 + $0x8] sm:$0xff] %v1832
    %1849 = vst [vmem:[#allocation11 + $0x10] sm:$0xff] %v1833
    %1850 = vst [vmem:[#allocation11 + $0x18] sm:$0xff] %v1834
    %1851 = vst [vmem:[#allocation11 + $0x20] sm:$0xff] %v1835
    %1852 = vst [vmem:[#allocation11 + $0x28] sm:$0xff] %v1836
    %1853 = vst [vmem:[#allocation11 + $0x30] sm:$0xff] %v1837
    %1854 = vst [vmem:[#allocation11 + $0x38] sm:$0xff] %v1838
    %1855 = vst [vmem:[#allocation11 + $0x40] sm:$0xff] %v1839
    %1856 = vst [vmem:[#allocation11 + $0x48] sm:$0xff] %v1840
    %1857 = vst [vmem:[#allocation11 + $0x50] sm:$0xff] %v1841
    %1858 = vst [vmem:[#allocation11 + $0x58] sm:$0xff] %v1842
    %1859 = vst [vmem:[#allocation11 + $0x60] sm:$0xff] %v1843
    %1860 = vst [vmem:[#allocation11 + $0x68] sm:$0xff] %v1844
    %1861 = vst [vmem:[#allocation11 + $0x70] sm:$0xff] %v1845
    %1862 = vst [vmem:[#allocation11 + $0x78] sm:$0xff] %v1846
    // Predicated region
    $region54: #{tpu_custom_call.1} parent=1 // pred_check
      _
    $region55: #{tpu_custom_call.1} parent=1 // pred_check_branch
      %1864 = sbr.rel (0) target = $region57
    $region56: #{tpu_custom_call.1} parent=1 // pred_region
      %s1866 = ssub.s32 2048, 2048
      %1867 = vsyncadd [#allocation4], %s1866
      %s1868 = sshll.u32 [#allocation11], 4
      %s1869 = int_to_ptr.vmem [resolvable:$true] %s1868
      %1874 = dma.vmem_to_hbm [thread:$0]  %s1869, 2048, %s8, [#allocation4], 128, 128, 8
    $region57: #{tpu_custom_call.1} parent=1 // pred_fallthru
      _
    // Predicated region
    $region58: #{tpu_custom_call.1} parent=1 // pred_check
      _
    $region59: #{tpu_custom_call.1} parent=1 // pred_check_branch
      %1876 = sbr.rel (0) target = $region61
    $region60: #{tpu_custom_call.1} parent=1 // pred_region
      %1877 = dma.done [#allocation4], 2048
    $region61: #{tpu_custom_call.1} parent=1 // pred_fallthru
      _
    %1878 = vsyncpa [#allocation3], 1
    %1879 = vsyncpa [#allocation6], 1
    %1880 = vsyncpa [#allocation9], 1
    %1881 = vsyncpa [#allocation4], 1

</llo_original>
